<compile_context>
chip_gen: v7x
topology: tpu7x:2x2x1
jax: 0.10.0
libtpu: 0.0.40
codegen_flags: <defaults>
</compile_context>

<pallas_src>
import jax
import jax.numpy as jnp
from jax.experimental import pallas as pl
from jax.experimental.pallas import tpu as pltpu  # noqa: F401  (TPU backend)

# ----------------------------- configuration --------------------------------
B, C, H, W = 2, 4, 16, 16          # input image batch (NCHW)
FEATURE_DIM = 64                   # stand-in for backbone.num_features (resnet50: 2048)
NUM_ATTRIBUTES = 16                # module default 100, scaled down
EMBED_DIM = 32                     # embedding_dim
NUM_HEADS = 8                      # numerically irrelevant: seq_len == 1
NUM_LAYERS = 3                     # num_transformer_layers
FF_DIM = 4 * EMBED_DIM             # dim_feedforward
LN_EPS = 1e-5                      # PyTorch LayerNorm default eps
LANE = 128                         # TPU lane width
A_PAD = LANE                       # attribute logits/probs padded to lane width
E_PAD = LANE                       # output projection padded to lane width


def _full_spec(shape):
    """BlockSpec covering the whole array (grid = ())."""
    return pl.BlockSpec(shape, lambda: (0,) * len(shape))


# ------------------------------ kernel helpers -------------------------------
def _layernorm(x, gamma, beta):
    """Single-pass LayerNorm: var = E[x^2] - E[x]^2.

    The two lane reductions are independent (no serial dependency on mu like
    the (x - mu)**2 form), matching PyTorch's biased-variance LayerNorm.
    """
    inv_n = 1.0 / x.shape[-1]
    mu = jnp.sum(x, axis=-1, keepdims=True) * inv_n
    ms = jnp.sum(x * x, axis=-1, keepdims=True) * inv_n
    var = ms - mu * mu
    return (x - mu) * jax.lax.rsqrt(var + LN_EPS) * gamma + beta


# ------------------------------- fused kernel --------------------------------
def fused_forward_kernel(img_ref,                              # [B, C, H*W]
                         w_bb_ref, b_bb_ref,                   # [C, F], [1, F]
                         w_d1_ref, b_d1_ref,                   # [F, F//2], [1, F//2]
                         w_d2_ref, b_d2_ref,                   # [F//2, A_PAD], [1, A_PAD]
                         emb_ref,                              # [A_PAD, E]
                         wv_ref, bv_ref, wo_ref, bo_ref,       # [L,E,E],[L,1,E],[L,E,E],[L,1,E]
                         g1_ref, be1_ref,                      # [L,1,E] x2
                         w1_ref, b1_ref, w2_ref, b2_ref,       # [L,E,FF],[L,1,FF],[L,FF,E],[L,1,E]
                         g2_ref, be2_ref,                      # [L,1,E] x2
                         w_out_ref, b_out_ref,                 # [E, E_PAD], [1, E_PAD]
                         probs_ref, comp_ref):                 # [B, A_PAD], [B, E_PAD]
    # ---- backbone stand-in: global average pool + Linear + ReLU -------------
    # TODO(synk): full timm resnet50 backbone not reproduced.
    pooled = jnp.mean(img_ref[...], axis=-1)                   # [B, C]  lane reduction
    # M=B=2, K=C=4 matmul is pure MXU padding -> do C unrolled VPU broadcast-FMAs.
    acc = jnp.zeros((B, FEATURE_DIM), jnp.float32)
    for c in range(C):
        acc = acc + pooled[:, c:c + 1] * w_bb_ref[c:c + 1, :]  # [B,1]*[1,F] -> [B,F]
    feat = jnp.maximum(acc + b_bb_ref[...], 0.0)               # [B, F]

    # ---- attribute detector: Linear -> ReLU -> Linear -> sigmoid ------------
    h = jnp.maximum(
        jnp.dot(feat, w_d1_ref[...], preferred_element_type=jnp.float32)
        + b_d1_ref[...], 0.0)                                  # [B, F//2]
    logits = (jnp.dot(h, w_d2_ref[...], preferred_element_type=jnp.float32)
              + b_d2_ref[...])                                 # [B, A_PAD] (lane-dense)
    probs = jax.nn.sigmoid(logits)                             # padding lanes -> 0.5 (harmless)
    probs_ref[...] = probs                                     # full 128-lane store

    # ---- weighted embedding sum: probs @ emb ---------------------------------
    # Padded attribute rows of emb are zero, so padding lanes contribute nothing.
    x = jnp.dot(probs, emb_ref[...], preferred_element_type=jnp.float32)  # [B, E]

    # ---- transformer encoder layers (statically unrolled, seq_len == 1) -----
    for l in range(NUM_LAYERS):
        # Self-attention with one key: softmax == 1 -> attn = out_proj(v_proj(x)).
        v = jnp.dot(x, wv_ref[l], preferred_element_type=jnp.float32) + bv_ref[l]
        attn = jnp.dot(v, wo_ref[l], preferred_element_type=jnp.float32) + bo_ref[l]
        y = _layernorm(x + attn, g1_ref[l], be1_ref[l])        # post-norm (norm_first=False)
        # Feed-forward: Linear -> GELU -> Linear.
        hid = jnp.dot(y, w1_ref[l], preferred_element_type=jnp.float32) + b1_ref[l]
        hid = jax.nn.gelu(hid, approximate=True)               # EUP tanh/exp path
        ff = jnp.dot(hid, w2_ref[l], preferred_element_type=jnp.float32) + b2_ref[l]
        x = _layernorm(y + ff, g2_ref[l], be2_ref[l])

    # ---- output projection (lane-dense, padded to 128 columns) --------------
    comp_ref[...] = (jnp.dot(x, w_out_ref[...], preferred_element_type=jnp.float32)
                     + b_out_ref[...])                         # full 128-lane store


# ------------------------------ pallas wrapper --------------------------------
def _forward_padded(img_flat, p):
    args = (img_flat,
            p['w_bb'], p['b_bb'], p['w_d1'], p['b_d1'], p['w_d2'], p['b_d2'], p['emb'],
            p['wv'], p['bv'], p['wo'], p['bo'],
            p['g1'], p['be1'], p['w1'], p['b1'], p['w2'], p['b2'], p['g2'], p['be2'],
            p['w_out'], p['b_out'])
    return pl.pallas_call(
        fused_forward_kernel,
        out_shape=(jax.ShapeDtypeStruct((B, A_PAD), jnp.float32),
                   jax.ShapeDtypeStruct((B, E_PAD), jnp.float32)),
        in_specs=[_full_spec(a.shape) for a in args],
        out_specs=(_full_spec((B, A_PAD)), _full_spec((B, E_PAD))),
    )(*args)


@jax.jit
def composite_attribute_analyzer(images, params):
    """Forward pass. images: [B, C, H, W] NCHW float32."""
    img_flat = images.reshape(B, C, H * W)                     # glue reshape
    probs_pad, comp_pad = _forward_padded(img_flat, params)
    attribute_probs = probs_pad[:, :NUM_ATTRIBUTES]
    compositional_features = comp_pad[:, :EMBED_DIM]
    return compositional_features, attribute_probs


# ------------------------------ parameter init --------------------------------
def init_params(key):
    keys = iter(jax.random.split(key, 128))

    def w(shape, scale=0.02):
        return (scale * jax.random.normal(next(keys), shape)).astype(jnp.float32)

    # Lane-dense padding: attribute axis padded to 128 (zero embedding rows,
    # zero detector columns) and output-projection columns padded to 128.
    emb = jnp.zeros((A_PAD, EMBED_DIM), jnp.float32)
    emb = emb.at[:NUM_ATTRIBUTES].set(w((NUM_ATTRIBUTES, EMBED_DIM), 1.0))  # nn.Embedding ~ N(0,1)

    w_d2 = jnp.zeros((FEATURE_DIM // 2, A_PAD), jnp.float32)
    w_d2 = w_d2.at[:, :NUM_ATTRIBUTES].set(w((FEATURE_DIM // 2, NUM_ATTRIBUTES)))

    w_out = jnp.zeros((EMBED_DIM, E_PAD), jnp.float32)
    w_out = w_out.at[:, :EMBED_DIM].set(w((EMBED_DIM, EMBED_DIM)))

    params = {
        'emb':   emb,
        'w_bb':  w((C, FEATURE_DIM)),
        'b_bb':  jnp.zeros((1, FEATURE_DIM), jnp.float32),
        'w_d1':  w((FEATURE_DIM, FEATURE_DIM // 2)),
        'b_d1':  jnp.zeros((1, FEATURE_DIM // 2), jnp.float32),
        'w_d2':  w_d2,
        'b_d2':  jnp.zeros((1, A_PAD), jnp.float32),
        'w_out': w_out,
        'b_out': jnp.zeros((1, E_PAD), jnp.float32),
    }

    # Transformer layer params, stacked along a leading [NUM_LAYERS] axis so the
    # fused kernel indexes them statically (ref[l]) while staying VMEM-resident.
    def make_layer():
        in_proj = w((3 * EMBED_DIM, EMBED_DIM))                # packed q/k/v, torch layout [3E, E]
        wv = jnp.transpose(in_proj[2 * EMBED_DIM:])            # only V is live for seq_len == 1
        return {
            'wv': wv,
            'bv': jnp.zeros((1, EMBED_DIM), jnp.float32),
            'wo': w((EMBED_DIM, EMBED_DIM)),
            'bo': jnp.zeros((1, EMBED_DIM), jnp.float32),
            'g1': jnp.ones((1, EMBED_DIM), jnp.float32),
            'be1': jnp.zeros((1, EMBED_DIM), jnp.float32),
            'w1': w((EMBED_DIM, FF_DIM)),
            'b1': jnp.zeros((1, FF_DIM), jnp.float32),
            'w2': w((FF_DIM, EMBED_DIM)),
            'b2': jnp.zeros((1, EMBED_DIM), jnp.float32),
            'g2': jnp.ones((1, EMBED_DIM), jnp.float32),
            'be2': jnp.zeros((1, EMBED_DIM), jnp.float32),
        }

    layers = [make_layer() for _ in range(NUM_LAYERS)]
    for name in layers[0]:
        params[name] = jnp.stack([lp[name] for lp in layers])  # [L, ...]
    return params


# ----------------------------------- main --------------------------------------
if __name__ == "__main__":
    key = jax.random.PRNGKey(0)
    k_img, k_par = jax.random.split(key)
    images = jax.random.normal(k_img, (B, C, H, W), dtype=jnp.float32)
    params = init_params(k_par)

    comp_feats, attr_probs = composite_attribute_analyzer(images, params)
    jax.block_until_ready((comp_feats, attr_probs))

    assert comp_feats.shape == (B, EMBED_DIM)
    assert attr_probs.shape == (B, NUM_ATTRIBUTES)
    assert bool(jnp.all(jnp.isfinite(comp_feats)))
    assert bool(jnp.all((attr_probs >= 0.0) & (attr_probs <= 1.0)))
    print("KERNEL_OK")
</pallas_src>

<mosaic_0001>
module attributes {stable_mosaic.version = 11 : i64} {
  func.func @fused_forward_kernel(%arg0: memref<2x4x256xf32, #tpu.memory_space<vmem>>, %arg1: memref<4x64xf32, #tpu.memory_space<vmem>>, %arg2: memref<1x64xf32, #tpu.memory_space<vmem>>, %arg3: memref<64x32xf32, #tpu.memory_space<vmem>>, %arg4: memref<1x32xf32, #tpu.memory_space<vmem>>, %arg5: memref<32x128xf32, #tpu.memory_space<vmem>>, %arg6: memref<1x128xf32, #tpu.memory_space<vmem>>, %arg7: memref<128x32xf32, #tpu.memory_space<vmem>>, %arg8: memref<3x32x32xf32, #tpu.memory_space<vmem>>, %arg9: memref<3x1x32xf32, #tpu.memory_space<vmem>>, %arg10: memref<3x32x32xf32, #tpu.memory_space<vmem>>, %arg11: memref<3x1x32xf32, #tpu.memory_space<vmem>>, %arg12: memref<3x1x32xf32, #tpu.memory_space<vmem>>, %arg13: memref<3x1x32xf32, #tpu.memory_space<vmem>>, %arg14: memref<3x32x128xf32, #tpu.memory_space<vmem>>, %arg15: memref<3x1x128xf32, #tpu.memory_space<vmem>>, %arg16: memref<3x128x32xf32, #tpu.memory_space<vmem>>, %arg17: memref<3x1x32xf32, #tpu.memory_space<vmem>>, %arg18: memref<3x1x32xf32, #tpu.memory_space<vmem>>, %arg19: memref<3x1x32xf32, #tpu.memory_space<vmem>>, %arg20: memref<32x128xf32, #tpu.memory_space<vmem>>, %arg21: memref<1x128xf32, #tpu.memory_space<vmem>>, %arg22: memref<2x128xf32, #tpu.memory_space<vmem>>, %arg23: memref<2x128xf32, #tpu.memory_space<vmem>>) attributes {dimension_semantics = [], scalar_prefetch = 0 : i64, scratch_operands = 0 : i64, tpu.core_type = #tpu.core_type<tc>} {
    %c0 = arith.constant 0 : index
    %c0_0 = arith.constant 0 : index
    %c0_1 = arith.constant 0 : index
    %0 = vector.load %arg0[%c0, %c0_0, %c0_1] : memref<2x4x256xf32, #tpu.memory_space<vmem>>, vector<2x4x256xf32>
    %cst = arith.constant dense<0.000000e+00> : vector<2x4xf32>
    %1 = vector.multi_reduction <add>, %0, %cst [2] : vector<2x4x256xf32> to vector<2x4xf32>
    %cst_2 = arith.constant 2.560000e+02 : f32
    %2 = vector.broadcast %cst_2 : f32 to vector<2x4xf32>
    %3 = arith.divf %1, %2 : vector<2x4xf32>
    %cst_3 = arith.constant 0.000000e+00 : f32
    %4 = vector.broadcast %cst_3 : f32 to vector<2x64xf32>
    %5 = vector.extract_strided_slice %3 {offsets = [0, 0], sizes = [2, 1], strides = [1, 1]} : vector<2x4xf32> to vector<2x1xf32>
    %c0_4 = arith.constant 0 : index
    %c0_5 = arith.constant 0 : index
    %6 = vector.load %arg1[%c0_4, %c0_5] : memref<4x64xf32, #tpu.memory_space<vmem>>, vector<1x64xf32>
    %7 = vector.broadcast %5 : vector<2x1xf32> to vector<2x64xf32>
    %8 = vector.broadcast %6 : vector<1x64xf32> to vector<2x64xf32>
    %9 = arith.mulf %7, %8 : vector<2x64xf32>
    %10 = arith.addf %4, %9 : vector<2x64xf32>
    %11 = vector.extract_strided_slice %3 {offsets = [0, 1], sizes = [2, 1], strides = [1, 1]} : vector<2x4xf32> to vector<2x1xf32>
    %c1 = arith.constant 1 : index
    %c0_6 = arith.constant 0 : index
    %12 = vector.load %arg1[%c1, %c0_6] : memref<4x64xf32, #tpu.memory_space<vmem>>, vector<1x64xf32>
    %13 = vector.broadcast %11 : vector<2x1xf32> to vector<2x64xf32>
    %14 = vector.broadcast %12 : vector<1x64xf32> to vector<2x64xf32>
    %15 = arith.mulf %13, %14 : vector<2x64xf32>
    %16 = arith.addf %10, %15 : vector<2x64xf32>
    %17 = vector.extract_strided_slice %3 {offsets = [0, 2], sizes = [2, 1], strides = [1, 1]} : vector<2x4xf32> to vector<2x1xf32>
    %c2 = arith.constant 2 : index
    %c0_7 = arith.constant 0 : index
    %18 = vector.load %arg1[%c2, %c0_7] : memref<4x64xf32, #tpu.memory_space<vmem>>, vector<1x64xf32>
    %19 = vector.broadcast %17 : vector<2x1xf32> to vector<2x64xf32>
    %20 = vector.broadcast %18 : vector<1x64xf32> to vector<2x64xf32>
    %21 = arith.mulf %19, %20 : vector<2x64xf32>
    %22 = arith.addf %16, %21 : vector<2x64xf32>
    %23 = vector.extract_strided_slice %3 {offsets = [0, 3], sizes = [2, 1], strides = [1, 1]} : vector<2x4xf32> to vector<2x1xf32>
    %c3 = arith.constant 3 : index
    %c0_8 = arith.constant 0 : index
    %24 = vector.load %arg1[%c3, %c0_8] : memref<4x64xf32, #tpu.memory_space<vmem>>, vector<1x64xf32>
    %25 = vector.broadcast %23 : vector<2x1xf32> to vector<2x64xf32>
    %26 = vector.broadcast %24 : vector<1x64xf32> to vector<2x64xf32>
    %27 = arith.mulf %25, %26 : vector<2x64xf32>
    %28 = arith.addf %22, %27 : vector<2x64xf32>
    %c0_9 = arith.constant 0 : index
    %c0_10 = arith.constant 0 : index
    %29 = vector.load %arg2[%c0_9, %c0_10] : memref<1x64xf32, #tpu.memory_space<vmem>>, vector<1x64xf32>
    %30 = vector.broadcast %29 : vector<1x64xf32> to vector<2x64xf32>
    %31 = arith.addf %28, %30 : vector<2x64xf32>
    %cst_11 = arith.constant 0.000000e+00 : f32
    %32 = vector.broadcast %cst_11 : f32 to vector<2x64xf32>
    %33 = arith.maximumf %31, %32 : vector<2x64xf32>
    %c0_12 = arith.constant 0 : index
    %c0_13 = arith.constant 0 : index
    %34 = vector.load %arg3[%c0_12, %c0_13] : memref<64x32xf32, #tpu.memory_space<vmem>>, vector<64x32xf32>
    %cst_14 = arith.constant dense<0.000000e+00> : vector<2x32xf32>
    %35 = tpu.matmul %33, %34, %cst_14 {dimension_numbers = #tpu.dot_dimension_numbers<[1], [0], [0], [1], [0, 0, 1, 1], [], []>} : vector<2x64xf32>, vector<64x32xf32>, vector<2x32xf32> -> vector<2x32xf32>
    %c0_15 = arith.constant 0 : index
    %c0_16 = arith.constant 0 : index
    %36 = vector.load %arg4[%c0_15, %c0_16] : memref<1x32xf32, #tpu.memory_space<vmem>>, vector<1x32xf32>
    %37 = vector.broadcast %36 : vector<1x32xf32> to vector<2x32xf32>
    %38 = arith.addf %35, %37 : vector<2x32xf32>
    %cst_17 = arith.constant 0.000000e+00 : f32
    %39 = vector.broadcast %cst_17 : f32 to vector<2x32xf32>
    %40 = arith.maximumf %38, %39 : vector<2x32xf32>
    %c0_18 = arith.constant 0 : index
    %c0_19 = arith.constant 0 : index
    %41 = vector.load %arg5[%c0_18, %c0_19] : memref<32x128xf32, #tpu.memory_space<vmem>>, vector<32x128xf32>
    %cst_20 = arith.constant dense<0.000000e+00> : vector<2x128xf32>
    %42 = tpu.matmul %40, %41, %cst_20 {dimension_numbers = #tpu.dot_dimension_numbers<[1], [0], [0], [1], [0, 0, 1, 1], [], []>} : vector<2x32xf32>, vector<32x128xf32>, vector<2x128xf32> -> vector<2x128xf32>
    %c0_21 = arith.constant 0 : index
    %c0_22 = arith.constant 0 : index
    %43 = vector.load %arg6[%c0_21, %c0_22] : memref<1x128xf32, #tpu.memory_space<vmem>>, vector<1x128xf32>
    %44 = vector.broadcast %43 : vector<1x128xf32> to vector<2x128xf32>
    %45 = arith.addf %42, %44 : vector<2x128xf32>
    %46 = arith.negf %45 : vector<2x128xf32>
    %47 = math.exp %46 : vector<2x128xf32>
    %cst_23 = arith.constant 1.000000e+00 : f32
    %48 = vector.broadcast %cst_23 : f32 to vector<2x128xf32>
    %49 = arith.addf %48, %47 : vector<2x128xf32>
    %50 = arith.divf %48, %49 : vector<2x128xf32>
    %c0_24 = arith.constant 0 : index
    %c0_25 = arith.constant 0 : index
    %51 = vector.load %arg22[%c0_24, %c0_25] : memref<2x128xf32, #tpu.memory_space<vmem>>, vector<2x128xf32>
    tpu.vector_store %arg22[%c0_24, %c0_25], %50 {strides = array<i32>} : memref<2x128xf32, #tpu.memory_space<vmem>>, vector<2x128xf32>,
    %c0_26 = arith.constant 0 : index
    %c0_27 = arith.constant 0 : index
    %52 = vector.load %arg7[%c0_26, %c0_27] : memref<128x32xf32, #tpu.memory_space<vmem>>, vector<128x32xf32>
    %cst_28 = arith.constant dense<0.000000e+00> : vector<2x32xf32>
    %53 = tpu.matmul %50, %52, %cst_28 {dimension_numbers = #tpu.dot_dimension_numbers<[1], [0], [0], [1], [0, 0, 1, 1], [], []>} : vector<2x128xf32>, vector<128x32xf32>, vector<2x32xf32> -> vector<2x32xf32>
    %c0_29 = arith.constant 0 : index
    %c0_30 = arith.constant 0 : index
    %c0_31 = arith.constant 0 : index
    %54 = vector.load %arg8[%c0_29, %c0_30, %c0_31] : memref<3x32x32xf32, #tpu.memory_space<vmem>>, vector<1x32x32xf32>
    %55 = vector.shape_cast %54 : vector<1x32x32xf32> to vector<32x32xf32>
    %cst_32 = arith.constant dense<0.000000e+00> : vector<2x32xf32>
    %56 = tpu.matmul %53, %55, %cst_32 {dimension_numbers = #tpu.dot_dimension_numbers<[1], [0], [0], [1], [0, 0, 1, 1], [], []>} : vector<2x32xf32>, vector<32x32xf32>, vector<2x32xf32> -> vector<2x32xf32>
    %c0_33 = arith.constant 0 : index
    %c0_34 = arith.constant 0 : index
    %c0_35 = arith.constant 0 : index
    %57 = vector.load %arg9[%c0_33, %c0_34, %c0_35] : memref<3x1x32xf32, #tpu.memory_space<vmem>>, vector<1x1x32xf32>
    %58 = vector.shape_cast %57 : vector<1x1x32xf32> to vector<1x32xf32>
    %59 = vector.broadcast %58 : vector<1x32xf32> to vector<2x32xf32>
    %60 = arith.addf %56, %59 : vector<2x32xf32>
    %c0_36 = arith.constant 0 : index
    %c0_37 = arith.constant 0 : index
    %c0_38 = arith.constant 0 : index
    %61 = vector.load %arg10[%c0_36, %c0_37, %c0_38] : memref<3x32x32xf32, #tpu.memory_space<vmem>>, vector<1x32x32xf32>
    %62 = vector.shape_cast %61 : vector<1x32x32xf32> to vector<32x32xf32>
    %cst_39 = arith.constant dense<0.000000e+00> : vector<2x32xf32>
    %63 = tpu.matmul %60, %62, %cst_39 {dimension_numbers = #tpu.dot_dimension_numbers<[1], [0], [0], [1], [0, 0, 1, 1], [], []>} : vector<2x32xf32>, vector<32x32xf32>, vector<2x32xf32> -> vector<2x32xf32>
    %c0_40 = arith.constant 0 : index
    %c0_41 = arith.constant 0 : index
    %c0_42 = arith.constant 0 : index
    %64 = vector.load %arg11[%c0_40, %c0_41, %c0_42] : memref<3x1x32xf32, #tpu.memory_space<vmem>>, vector<1x1x32xf32>
    %65 = vector.shape_cast %64 : vector<1x1x32xf32> to vector<1x32xf32>
    %66 = vector.broadcast %65 : vector<1x32xf32> to vector<2x32xf32>
    %67 = arith.addf %63, %66 : vector<2x32xf32>
    %68 = arith.addf %53, %67 : vector<2x32xf32>
    %c0_43 = arith.constant 0 : index
    %c0_44 = arith.constant 0 : index
    %c0_45 = arith.constant 0 : index
    %69 = vector.load %arg12[%c0_43, %c0_44, %c0_45] : memref<3x1x32xf32, #tpu.memory_space<vmem>>, vector<1x1x32xf32>
    %70 = vector.shape_cast %69 : vector<1x1x32xf32> to vector<1x32xf32>
    %c0_46 = arith.constant 0 : index
    %c0_47 = arith.constant 0 : index
    %c0_48 = arith.constant 0 : index
    %71 = vector.load %arg13[%c0_46, %c0_47, %c0_48] : memref<3x1x32xf32, #tpu.memory_space<vmem>>, vector<1x1x32xf32>
    %72 = vector.shape_cast %71 : vector<1x1x32xf32> to vector<1x32xf32>
    %cst_49 = arith.constant dense<0.000000e+00> : vector<2xf32>
    %73 = vector.multi_reduction <add>, %68, %cst_49 [1] : vector<2x32xf32> to vector<2xf32>
    %74 = vector.shape_cast %73 : vector<2xf32> to vector<2x1xf32>
    %cst_50 = arith.constant 3.125000e-02 : f32
    %75 = vector.broadcast %cst_50 : f32 to vector<2x1xf32>
    %76 = arith.mulf %74, %75 : vector<2x1xf32>
    %77 = arith.mulf %68, %68 : vector<2x32xf32>
    %cst_51 = arith.constant dense<0.000000e+00> : vector<2xf32>
    %78 = vector.multi_reduction <add>, %77, %cst_51 [1] : vector<2x32xf32> to vector<2xf32>
    %79 = vector.shape_cast %78 : vector<2xf32> to vector<2x1xf32>
    %cst_52 = arith.constant 3.125000e-02 : f32
    %80 = vector.broadcast %cst_52 : f32 to vector<2x1xf32>
    %81 = arith.mulf %79, %80 : vector<2x1xf32>
    %82 = arith.mulf %76, %76 : vector<2x1xf32>
    %83 = arith.subf %81, %82 : vector<2x1xf32>
    %84 = vector.broadcast %76 : vector<2x1xf32> to vector<2x32xf32>
    %85 = arith.subf %68, %84 : vector<2x32xf32>
    %cst_53 = arith.constant 9.99999974E-6 : f32
    %86 = vector.broadcast %cst_53 : f32 to vector<2x1xf32>
    %87 = arith.addf %83, %86 : vector<2x1xf32>
    %88 = math.rsqrt %87 : vector<2x1xf32>
    %89 = vector.broadcast %88 : vector<2x1xf32> to vector<2x32xf32>
    %90 = arith.mulf %85, %89 : vector<2x32xf32>
    %91 = vector.broadcast %70 : vector<1x32xf32> to vector<2x32xf32>
    %92 = arith.mulf %90, %91 : vector<2x32xf32>
    %93 = vector.broadcast %72 : vector<1x32xf32> to vector<2x32xf32>
    %94 = arith.addf %92, %93 : vector<2x32xf32>
    %c0_54 = arith.constant 0 : index
    %c0_55 = arith.constant 0 : index
    %c0_56 = arith.constant 0 : index
    %95 = vector.load %arg14[%c0_54, %c0_55, %c0_56] : memref<3x32x128xf32, #tpu.memory_space<vmem>>, vector<1x32x128xf32>
    %96 = vector.shape_cast %95 : vector<1x32x128xf32> to vector<32x128xf32>
    %cst_57 = arith.constant dense<0.000000e+00> : vector<2x128xf32>
    %97 = tpu.matmul %94, %96, %cst_57 {dimension_numbers = #tpu.dot_dimension_numbers<[1], [0], [0], [1], [0, 0, 1, 1], [], []>} : vector<2x32xf32>, vector<32x128xf32>, vector<2x128xf32> -> vector<2x128xf32>
    %c0_58 = arith.constant 0 : index
    %c0_59 = arith.constant 0 : index
    %c0_60 = arith.constant 0 : index
    %98 = vector.load %arg15[%c0_58, %c0_59, %c0_60] : memref<3x1x128xf32, #tpu.memory_space<vmem>>, vector<1x1x128xf32>
    %99 = vector.shape_cast %98 : vector<1x1x128xf32> to vector<1x128xf32>
    %100 = vector.broadcast %99 : vector<1x128xf32> to vector<2x128xf32>
    %101 = arith.addf %97, %100 : vector<2x128xf32>
    %102 = arith.mulf %101, %101 : vector<2x128xf32>
    %103 = arith.mulf %101, %102 : vector<2x128xf32>
    %cst_61 = arith.constant 4.471500e-02 : f32
    %104 = vector.broadcast %cst_61 : f32 to vector<2x128xf32>
    %105 = arith.mulf %104, %103 : vector<2x128xf32>
    %106 = arith.addf %101, %105 : vector<2x128xf32>
    %cst_62 = arith.constant 0.797884583 : f32
    %107 = vector.broadcast %cst_62 : f32 to vector<2x128xf32>
    %108 = arith.mulf %107, %106 : vector<2x128xf32>
    %109 = math.tanh %108 : vector<2x128xf32>
    %cst_63 = arith.constant 1.000000e+00 : f32
    %110 = vector.broadcast %cst_63 : f32 to vector<2x128xf32>
    %111 = arith.addf %110, %109 : vector<2x128xf32>
    %cst_64 = arith.constant 5.000000e-01 : f32
    %112 = vector.broadcast %cst_64 : f32 to vector<2x128xf32>
    %113 = arith.mulf %112, %111 : vector<2x128xf32>
    %114 = arith.mulf %101, %113 : vector<2x128xf32>
    %c0_65 = arith.constant 0 : index
    %c0_66 = arith.constant 0 : index
    %c0_67 = arith.constant 0 : index
    %115 = vector.load %arg16[%c0_65, %c0_66, %c0_67] : memref<3x128x32xf32, #tpu.memory_space<vmem>>, vector<1x128x32xf32>
    %116 = vector.shape_cast %115 : vector<1x128x32xf32> to vector<128x32xf32>
    %cst_68 = arith.constant dense<0.000000e+00> : vector<2x32xf32>
    %117 = tpu.matmul %114, %116, %cst_68 {dimension_numbers = #tpu.dot_dimension_numbers<[1], [0], [0], [1], [0, 0, 1, 1], [], []>} : vector<2x128xf32>, vector<128x32xf32>, vector<2x32xf32> -> vector<2x32xf32>
    %c0_69 = arith.constant 0 : index
    %c0_70 = arith.constant 0 : index
    %c0_71 = arith.constant 0 : index
    %118 = vector.load %arg17[%c0_69, %c0_70, %c0_71] : memref<3x1x32xf32, #tpu.memory_space<vmem>>, vector<1x1x32xf32>
    %119 = vector.shape_cast %118 : vector<1x1x32xf32> to vector<1x32xf32>
    %120 = vector.broadcast %119 : vector<1x32xf32> to vector<2x32xf32>
    %121 = arith.addf %117, %120 : vector<2x32xf32>
    %122 = arith.addf %94, %121 : vector<2x32xf32>
    %c0_72 = arith.constant 0 : index
    %c0_73 = arith.constant 0 : index
    %c0_74 = arith.constant 0 : index
    %123 = vector.load %arg18[%c0_72, %c0_73, %c0_74] : memref<3x1x32xf32, #tpu.memory_space<vmem>>, vector<1x1x32xf32>
    %124 = vector.shape_cast %123 : vector<1x1x32xf32> to vector<1x32xf32>
    %c0_75 = arith.constant 0 : index
    %c0_76 = arith.constant 0 : index
    %c0_77 = arith.constant 0 : index
    %125 = vector.load %arg19[%c0_75, %c0_76, %c0_77] : memref<3x1x32xf32, #tpu.memory_space<vmem>>, vector<1x1x32xf32>
    %126 = vector.shape_cast %125 : vector<1x1x32xf32> to vector<1x32xf32>
    %cst_78 = arith.constant dense<0.000000e+00> : vector<2xf32>
    %127 = vector.multi_reduction <add>, %122, %cst_78 [1] : vector<2x32xf32> to vector<2xf32>
    %128 = vector.shape_cast %127 : vector<2xf32> to vector<2x1xf32>
    %cst_79 = arith.constant 3.125000e-02 : f32
    %129 = vector.broadcast %cst_79 : f32 to vector<2x1xf32>
    %130 = arith.mulf %128, %129 : vector<2x1xf32>
    %131 = arith.mulf %122, %122 : vector<2x32xf32>
    %cst_80 = arith.constant dense<0.000000e+00> : vector<2xf32>
    %132 = vector.multi_reduction <add>, %131, %cst_80 [1] : vector<2x32xf32> to vector<2xf32>
    %133 = vector.shape_cast %132 : vector<2xf32> to vector<2x1xf32>
    %cst_81 = arith.constant 3.125000e-02 : f32
    %134 = vector.broadcast %cst_81 : f32 to vector<2x1xf32>
    %135 = arith.mulf %133, %134 : vector<2x1xf32>
    %136 = arith.mulf %130, %130 : vector<2x1xf32>
    %137 = arith.subf %135, %136 : vector<2x1xf32>
    %138 = vector.broadcast %130 : vector<2x1xf32> to vector<2x32xf32>
    %139 = arith.subf %122, %138 : vector<2x32xf32>
    %cst_82 = arith.constant 9.99999974E-6 : f32
    %140 = vector.broadcast %cst_82 : f32 to vector<2x1xf32>
    %141 = arith.addf %137, %140 : vector<2x1xf32>
    %142 = math.rsqrt %141 : vector<2x1xf32>
    %143 = vector.broadcast %142 : vector<2x1xf32> to vector<2x32xf32>
    %144 = arith.mulf %139, %143 : vector<2x32xf32>
    %145 = vector.broadcast %124 : vector<1x32xf32> to vector<2x32xf32>
    %146 = arith.mulf %144, %145 : vector<2x32xf32>
    %147 = vector.broadcast %126 : vector<1x32xf32> to vector<2x32xf32>
    %148 = arith.addf %146, %147 : vector<2x32xf32>
    %c1_83 = arith.constant 1 : index
    %c0_84 = arith.constant 0 : index
    %c0_85 = arith.constant 0 : index
    %149 = vector.load %arg8[%c1_83, %c0_84, %c0_85] : memref<3x32x32xf32, #tpu.memory_space<vmem>>, vector<1x32x32xf32>
    %150 = vector.shape_cast %149 : vector<1x32x32xf32> to vector<32x32xf32>
    %cst_86 = arith.constant dense<0.000000e+00> : vector<2x32xf32>
    %151 = tpu.matmul %148, %150, %cst_86 {dimension_numbers = #tpu.dot_dimension_numbers<[1], [0], [0], [1], [0, 0, 1, 1], [], []>} : vector<2x32xf32>, vector<32x32xf32>, vector<2x32xf32> -> vector<2x32xf32>
    %c1_87 = arith.constant 1 : index
    %c0_88 = arith.constant 0 : index
    %c0_89 = arith.constant 0 : index
    %152 = vector.load %arg9[%c1_87, %c0_88, %c0_89] : memref<3x1x32xf32, #tpu.memory_space<vmem>>, vector<1x1x32xf32>
    %153 = vector.shape_cast %152 : vector<1x1x32xf32> to vector<1x32xf32>
    %154 = vector.broadcast %153 : vector<1x32xf32> to vector<2x32xf32>
    %155 = arith.addf %151, %154 : vector<2x32xf32>
    %c1_90 = arith.constant 1 : index
    %c0_91 = arith.constant 0 : index
    %c0_92 = arith.constant 0 : index
    %156 = vector.load %arg10[%c1_90, %c0_91, %c0_92] : memref<3x32x32xf32, #tpu.memory_space<vmem>>, vector<1x32x32xf32>
    %157 = vector.shape_cast %156 : vector<1x32x32xf32> to vector<32x32xf32>
    %cst_93 = arith.constant dense<0.000000e+00> : vector<2x32xf32>
    %158 = tpu.matmul %155, %157, %cst_93 {dimension_numbers = #tpu.dot_dimension_numbers<[1], [0], [0], [1], [0, 0, 1, 1], [], []>} : vector<2x32xf32>, vector<32x32xf32>, vector<2x32xf32> -> vector<2x32xf32>
    %c1_94 = arith.constant 1 : index
    %c0_95 = arith.constant 0 : index
    %c0_96 = arith.constant 0 : index
    %159 = vector.load %arg11[%c1_94, %c0_95, %c0_96] : memref<3x1x32xf32, #tpu.memory_space<vmem>>, vector<1x1x32xf32>
    %160 = vector.shape_cast %159 : vector<1x1x32xf32> to vector<1x32xf32>
    %161 = vector.broadcast %160 : vector<1x32xf32> to vector<2x32xf32>
    %162 = arith.addf %158, %161 : vector<2x32xf32>
    %163 = arith.addf %148, %162 : vector<2x32xf32>
    %c1_97 = arith.constant 1 : index
    %c0_98 = arith.constant 0 : index
    %c0_99 = arith.constant 0 : index
    %164 = vector.load %arg12[%c1_97, %c0_98, %c0_99] : memref<3x1x32xf32, #tpu.memory_space<vmem>>, vector<1x1x32xf32>
    %165 = vector.shape_cast %164 : vector<1x1x32xf32> to vector<1x32xf32>
    %c1_100 = arith.constant 1 : index
    %c0_101 = arith.constant 0 : index
    %c0_102 = arith.constant 0 : index
    %166 = vector.load %arg13[%c1_100, %c0_101, %c0_102] : memref<3x1x32xf32, #tpu.memory_space<vmem>>, vector<1x1x32xf32>
    %167 = vector.shape_cast %166 : vector<1x1x32xf32> to vector<1x32xf32>
    %cst_103 = arith.constant dense<0.000000e+00> : vector<2xf32>
    %168 = vector.multi_reduction <add>, %163, %cst_103 [1] : vector<2x32xf32> to vector<2xf32>
    %169 = vector.shape_cast %168 : vector<2xf32> to vector<2x1xf32>
    %cst_104 = arith.constant 3.125000e-02 : f32
    %170 = vector.broadcast %cst_104 : f32 to vector<2x1xf32>
    %171 = arith.mulf %169, %170 : vector<2x1xf32>
    %172 = arith.mulf %163, %163 : vector<2x32xf32>
    %cst_105 = arith.constant dense<0.000000e+00> : vector<2xf32>
    %173 = vector.multi_reduction <add>, %172, %cst_105 [1] : vector<2x32xf32> to vector<2xf32>
    %174 = vector.shape_cast %173 : vector<2xf32> to vector<2x1xf32>
    %cst_106 = arith.constant 3.125000e-02 : f32
    %175 = vector.broadcast %cst_106 : f32 to vector<2x1xf32>
    %176 = arith.mulf %174, %175 : vector<2x1xf32>
    %177 = arith.mulf %171, %171 : vector<2x1xf32>
    %178 = arith.subf %176, %177 : vector<2x1xf32>
    %179 = vector.broadcast %171 : vector<2x1xf32> to vector<2x32xf32>
    %180 = arith.subf %163, %179 : vector<2x32xf32>
    %cst_107 = arith.constant 9.99999974E-6 : f32
    %181 = vector.broadcast %cst_107 : f32 to vector<2x1xf32>
    %182 = arith.addf %178, %181 : vector<2x1xf32>
    %183 = math.rsqrt %182 : vector<2x1xf32>
    %184 = vector.broadcast %183 : vector<2x1xf32> to vector<2x32xf32>
    %185 = arith.mulf %180, %184 : vector<2x32xf32>
    %186 = vector.broadcast %165 : vector<1x32xf32> to vector<2x32xf32>
    %187 = arith.mulf %185, %186 : vector<2x32xf32>
    %188 = vector.broadcast %167 : vector<1x32xf32> to vector<2x32xf32>
    %189 = arith.addf %187, %188 : vector<2x32xf32>
    %c1_108 = arith.constant 1 : index
    %c0_109 = arith.constant 0 : index
    %c0_110 = arith.constant 0 : index
    %190 = vector.load %arg14[%c1_108, %c0_109, %c0_110] : memref<3x32x128xf32, #tpu.memory_space<vmem>>, vector<1x32x128xf32>
    %191 = vector.shape_cast %190 : vector<1x32x128xf32> to vector<32x128xf32>
    %cst_111 = arith.constant dense<0.000000e+00> : vector<2x128xf32>
    %192 = tpu.matmul %189, %191, %cst_111 {dimension_numbers = #tpu.dot_dimension_numbers<[1], [0], [0], [1], [0, 0, 1, 1], [], []>} : vector<2x32xf32>, vector<32x128xf32>, vector<2x128xf32> -> vector<2x128xf32>
    %c1_112 = arith.constant 1 : index
    %c0_113 = arith.constant 0 : index
    %c0_114 = arith.constant 0 : index
    %193 = vector.load %arg15[%c1_112, %c0_113, %c0_114] : memref<3x1x128xf32, #tpu.memory_space<vmem>>, vector<1x1x128xf32>
    %194 = vector.shape_cast %193 : vector<1x1x128xf32> to vector<1x128xf32>
    %195 = vector.broadcast %194 : vector<1x128xf32> to vector<2x128xf32>
    %196 = arith.addf %192, %195 : vector<2x128xf32>
    %197 = arith.mulf %196, %196 : vector<2x128xf32>
    %198 = arith.mulf %196, %197 : vector<2x128xf32>
    %cst_115 = arith.constant 4.471500e-02 : f32
    %199 = vector.broadcast %cst_115 : f32 to vector<2x128xf32>
    %200 = arith.mulf %199, %198 : vector<2x128xf32>
    %201 = arith.addf %196, %200 : vector<2x128xf32>
    %cst_116 = arith.constant 0.797884583 : f32
    %202 = vector.broadcast %cst_116 : f32 to vector<2x128xf32>
    %203 = arith.mulf %202, %201 : vector<2x128xf32>
    %204 = math.tanh %203 : vector<2x128xf32>
    %cst_117 = arith.constant 1.000000e+00 : f32
    %205 = vector.broadcast %cst_117 : f32 to vector<2x128xf32>
    %206 = arith.addf %205, %204 : vector<2x128xf32>
    %cst_118 = arith.constant 5.000000e-01 : f32
    %207 = vector.broadcast %cst_118 : f32 to vector<2x128xf32>
    %208 = arith.mulf %207, %206 : vector<2x128xf32>
    %209 = arith.mulf %196, %208 : vector<2x128xf32>
    %c1_119 = arith.constant 1 : index
    %c0_120 = arith.constant 0 : index
    %c0_121 = arith.constant 0 : index
    %210 = vector.load %arg16[%c1_119, %c0_120, %c0_121] : memref<3x128x32xf32, #tpu.memory_space<vmem>>, vector<1x128x32xf32>
    %211 = vector.shape_cast %210 : vector<1x128x32xf32> to vector<128x32xf32>
    %cst_122 = arith.constant dense<0.000000e+00> : vector<2x32xf32>
    %212 = tpu.matmul %209, %211, %cst_122 {dimension_numbers = #tpu.dot_dimension_numbers<[1], [0], [0], [1], [0, 0, 1, 1], [], []>} : vector<2x128xf32>, vector<128x32xf32>, vector<2x32xf32> -> vector<2x32xf32>
    %c1_123 = arith.constant 1 : index
    %c0_124 = arith.constant 0 : index
    %c0_125 = arith.constant 0 : index
    %213 = vector.load %arg17[%c1_123, %c0_124, %c0_125] : memref<3x1x32xf32, #tpu.memory_space<vmem>>, vector<1x1x32xf32>
    %214 = vector.shape_cast %213 : vector<1x1x32xf32> to vector<1x32xf32>
    %215 = vector.broadcast %214 : vector<1x32xf32> to vector<2x32xf32>
    %216 = arith.addf %212, %215 : vector<2x32xf32>
    %217 = arith.addf %189, %216 : vector<2x32xf32>
    %c1_126 = arith.constant 1 : index
    %c0_127 = arith.constant 0 : index
    %c0_128 = arith.constant 0 : index
    %218 = vector.load %arg18[%c1_126, %c0_127, %c0_128] : memref<3x1x32xf32, #tpu.memory_space<vmem>>, vector<1x1x32xf32>
    %219 = vector.shape_cast %218 : vector<1x1x32xf32> to vector<1x32xf32>
    %c1_129 = arith.constant 1 : index
    %c0_130 = arith.constant 0 : index
    %c0_131 = arith.constant 0 : index
    %220 = vector.load %arg19[%c1_129, %c0_130, %c0_131] : memref<3x1x32xf32, #tpu.memory_space<vmem>>, vector<1x1x32xf32>
    %221 = vector.shape_cast %220 : vector<1x1x32xf32> to vector<1x32xf32>
    %cst_132 = arith.constant dense<0.000000e+00> : vector<2xf32>
    %222 = vector.multi_reduction <add>, %217, %cst_132 [1] : vector<2x32xf32> to vector<2xf32>
    %223 = vector.shape_cast %222 : vector<2xf32> to vector<2x1xf32>
    %cst_133 = arith.constant 3.125000e-02 : f32
    %224 = vector.broadcast %cst_133 : f32 to vector<2x1xf32>
    %225 = arith.mulf %223, %224 : vector<2x1xf32>
    %226 = arith.mulf %217, %217 : vector<2x32xf32>
    %cst_134 = arith.constant dense<0.000000e+00> : vector<2xf32>
    %227 = vector.multi_reduction <add>, %226, %cst_134 [1] : vector<2x32xf32> to vector<2xf32>
    %228 = vector.shape_cast %227 : vector<2xf32> to vector<2x1xf32>
    %cst_135 = arith.constant 3.125000e-02 : f32
    %229 = vector.broadcast %cst_135 : f32 to vector<2x1xf32>
    %230 = arith.mulf %228, %229 : vector<2x1xf32>
    %231 = arith.mulf %225, %225 : vector<2x1xf32>
    %232 = arith.subf %230, %231 : vector<2x1xf32>
    %233 = vector.broadcast %225 : vector<2x1xf32> to vector<2x32xf32>
    %234 = arith.subf %217, %233 : vector<2x32xf32>
    %cst_136 = arith.constant 9.99999974E-6 : f32
    %235 = vector.broadcast %cst_136 : f32 to vector<2x1xf32>
    %236 = arith.addf %232, %235 : vector<2x1xf32>
    %237 = math.rsqrt %236 : vector<2x1xf32>
    %238 = vector.broadcast %237 : vector<2x1xf32> to vector<2x32xf32>
    %239 = arith.mulf %234, %238 : vector<2x32xf32>
    %240 = vector.broadcast %219 : vector<1x32xf32> to vector<2x32xf32>
    %241 = arith.mulf %239, %240 : vector<2x32xf32>
    %242 = vector.broadcast %221 : vector<1x32xf32> to vector<2x32xf32>
    %243 = arith.addf %241, %242 : vector<2x32xf32>
    %c2_137 = arith.constant 2 : index
    %c0_138 = arith.constant 0 : index
    %c0_139 = arith.constant 0 : index
    %244 = vector.load %arg8[%c2_137, %c0_138, %c0_139] : memref<3x32x32xf32, #tpu.memory_space<vmem>>, vector<1x32x32xf32>
    %245 = vector.shape_cast %244 : vector<1x32x32xf32> to vector<32x32xf32>
    %cst_140 = arith.constant dense<0.000000e+00> : vector<2x32xf32>
    %246 = tpu.matmul %243, %245, %cst_140 {dimension_numbers = #tpu.dot_dimension_numbers<[1], [0], [0], [1], [0, 0, 1, 1], [], []>} : vector<2x32xf32>, vector<32x32xf32>, vector<2x32xf32> -> vector<2x32xf32>
    %c2_141 = arith.constant 2 : index
    %c0_142 = arith.constant 0 : index
    %c0_143 = arith.constant 0 : index
    %247 = vector.load %arg9[%c2_141, %c0_142, %c0_143] : memref<3x1x32xf32, #tpu.memory_space<vmem>>, vector<1x1x32xf32>
    %248 = vector.shape_cast %247 : vector<1x1x32xf32> to vector<1x32xf32>
    %249 = vector.broadcast %248 : vector<1x32xf32> to vector<2x32xf32>
    %250 = arith.addf %246, %249 : vector<2x32xf32>
    %c2_144 = arith.constant 2 : index
    %c0_145 = arith.constant 0 : index
    %c0_146 = arith.constant 0 : index
    %251 = vector.load %arg10[%c2_144, %c0_145, %c0_146] : memref<3x32x32xf32, #tpu.memory_space<vmem>>, vector<1x32x32xf32>
    %252 = vector.shape_cast %251 : vector<1x32x32xf32> to vector<32x32xf32>
    %cst_147 = arith.constant dense<0.000000e+00> : vector<2x32xf32>
    %253 = tpu.matmul %250, %252, %cst_147 {dimension_numbers = #tpu.dot_dimension_numbers<[1], [0], [0], [1], [0, 0, 1, 1], [], []>} : vector<2x32xf32>, vector<32x32xf32>, vector<2x32xf32> -> vector<2x32xf32>
    %c2_148 = arith.constant 2 : index
    %c0_149 = arith.constant 0 : index
    %c0_150 = arith.constant 0 : index
    %254 = vector.load %arg11[%c2_148, %c0_149, %c0_150] : memref<3x1x32xf32, #tpu.memory_space<vmem>>, vector<1x1x32xf32>
    %255 = vector.shape_cast %254 : vector<1x1x32xf32> to vector<1x32xf32>
    %256 = vector.broadcast %255 : vector<1x32xf32> to vector<2x32xf32>
    %257 = arith.addf %253, %256 : vector<2x32xf32>
    %258 = arith.addf %243, %257 : vector<2x32xf32>
    %c2_151 = arith.constant 2 : index
    %c0_152 = arith.constant 0 : index
    %c0_153 = arith.constant 0 : index
    %259 = vector.load %arg12[%c2_151, %c0_152, %c0_153] : memref<3x1x32xf32, #tpu.memory_space<vmem>>, vector<1x1x32xf32>
    %260 = vector.shape_cast %259 : vector<1x1x32xf32> to vector<1x32xf32>
    %c2_154 = arith.constant 2 : index
    %c0_155 = arith.constant 0 : index
    %c0_156 = arith.constant 0 : index
    %261 = vector.load %arg13[%c2_154, %c0_155, %c0_156] : memref<3x1x32xf32, #tpu.memory_space<vmem>>, vector<1x1x32xf32>
    %262 = vector.shape_cast %261 : vector<1x1x32xf32> to vector<1x32xf32>
    %cst_157 = arith.constant dense<0.000000e+00> : vector<2xf32>
    %263 = vector.multi_reduction <add>, %258, %cst_157 [1] : vector<2x32xf32> to vector<2xf32>
    %264 = vector.shape_cast %263 : vector<2xf32> to vector<2x1xf32>
    %cst_158 = arith.constant 3.125000e-02 : f32
    %265 = vector.broadcast %cst_158 : f32 to vector<2x1xf32>
    %266 = arith.mulf %264, %265 : vector<2x1xf32>
    %267 = arith.mulf %258, %258 : vector<2x32xf32>
    %cst_159 = arith.constant dense<0.000000e+00> : vector<2xf32>
    %268 = vector.multi_reduction <add>, %267, %cst_159 [1] : vector<2x32xf32> to vector<2xf32>
    %269 = vector.shape_cast %268 : vector<2xf32> to vector<2x1xf32>
    %cst_160 = arith.constant 3.125000e-02 : f32
    %270 = vector.broadcast %cst_160 : f32 to vector<2x1xf32>
    %271 = arith.mulf %269, %270 : vector<2x1xf32>
    %272 = arith.mulf %266, %266 : vector<2x1xf32>
    %273 = arith.subf %271, %272 : vector<2x1xf32>
    %274 = vector.broadcast %266 : vector<2x1xf32> to vector<2x32xf32>
    %275 = arith.subf %258, %274 : vector<2x32xf32>
    %cst_161 = arith.constant 9.99999974E-6 : f32
    %276 = vector.broadcast %cst_161 : f32 to vector<2x1xf32>
    %277 = arith.addf %273, %276 : vector<2x1xf32>
    %278 = math.rsqrt %277 : vector<2x1xf32>
    %279 = vector.broadcast %278 : vector<2x1xf32> to vector<2x32xf32>
    %280 = arith.mulf %275, %279 : vector<2x32xf32>
    %281 = vector.broadcast %260 : vector<1x32xf32> to vector<2x32xf32>
    %282 = arith.mulf %280, %281 : vector<2x32xf32>
    %283 = vector.broadcast %262 : vector<1x32xf32> to vector<2x32xf32>
    %284 = arith.addf %282, %283 : vector<2x32xf32>
    %c2_162 = arith.constant 2 : index
    %c0_163 = arith.constant 0 : index
    %c0_164 = arith.constant 0 : index
    %285 = vector.load %arg14[%c2_162, %c0_163, %c0_164] : memref<3x32x128xf32, #tpu.memory_space<vmem>>, vector<1x32x128xf32>
    %286 = vector.shape_cast %285 : vector<1x32x128xf32> to vector<32x128xf32>
    %cst_165 = arith.constant dense<0.000000e+00> : vector<2x128xf32>
    %287 = tpu.matmul %284, %286, %cst_165 {dimension_numbers = #tpu.dot_dimension_numbers<[1], [0], [0], [1], [0, 0, 1, 1], [], []>} : vector<2x32xf32>, vector<32x128xf32>, vector<2x128xf32> -> vector<2x128xf32>
    %c2_166 = arith.constant 2 : index
    %c0_167 = arith.constant 0 : index
    %c0_168 = arith.constant 0 : index
    %288 = vector.load %arg15[%c2_166, %c0_167, %c0_168] : memref<3x1x128xf32, #tpu.memory_space<vmem>>, vector<1x1x128xf32>
    %289 = vector.shape_cast %288 : vector<1x1x128xf32> to vector<1x128xf32>
    %290 = vector.broadcast %289 : vector<1x128xf32> to vector<2x128xf32>
    %291 = arith.addf %287, %290 : vector<2x128xf32>
    %292 = arith.mulf %291, %291 : vector<2x128xf32>
    %293 = arith.mulf %291, %292 : vector<2x128xf32>
    %cst_169 = arith.constant 4.471500e-02 : f32
    %294 = vector.broadcast %cst_169 : f32 to vector<2x128xf32>
    %295 = arith.mulf %294, %293 : vector<2x128xf32>
    %296 = arith.addf %291, %295 : vector<2x128xf32>
    %cst_170 = arith.constant 0.797884583 : f32
    %297 = vector.broadcast %cst_170 : f32 to vector<2x128xf32>
    %298 = arith.mulf %297, %296 : vector<2x128xf32>
    %299 = math.tanh %298 : vector<2x128xf32>
    %cst_171 = arith.constant 1.000000e+00 : f32
    %300 = vector.broadcast %cst_171 : f32 to vector<2x128xf32>
    %301 = arith.addf %300, %299 : vector<2x128xf32>
    %cst_172 = arith.constant 5.000000e-01 : f32
    %302 = vector.broadcast %cst_172 : f32 to vector<2x128xf32>
    %303 = arith.mulf %302, %301 : vector<2x128xf32>
    %304 = arith.mulf %291, %303 : vector<2x128xf32>
    %c2_173 = arith.constant 2 : index
    %c0_174 = arith.constant 0 : index
    %c0_175 = arith.constant 0 : index
    %305 = vector.load %arg16[%c2_173, %c0_174, %c0_175] : memref<3x128x32xf32, #tpu.memory_space<vmem>>, vector<1x128x32xf32>
    %306 = vector.shape_cast %305 : vector<1x128x32xf32> to vector<128x32xf32>
    %cst_176 = arith.constant dense<0.000000e+00> : vector<2x32xf32>
    %307 = tpu.matmul %304, %306, %cst_176 {dimension_numbers = #tpu.dot_dimension_numbers<[1], [0], [0], [1], [0, 0, 1, 1], [], []>} : vector<2x128xf32>, vector<128x32xf32>, vector<2x32xf32> -> vector<2x32xf32>
    %c2_177 = arith.constant 2 : index
    %c0_178 = arith.constant 0 : index
    %c0_179 = arith.constant 0 : index
    %308 = vector.load %arg17[%c2_177, %c0_178, %c0_179] : memref<3x1x32xf32, #tpu.memory_space<vmem>>, vector<1x1x32xf32>
    %309 = vector.shape_cast %308 : vector<1x1x32xf32> to vector<1x32xf32>
    %310 = vector.broadcast %309 : vector<1x32xf32> to vector<2x32xf32>
    %311 = arith.addf %307, %310 : vector<2x32xf32>
    %312 = arith.addf %284, %311 : vector<2x32xf32>
    %c2_180 = arith.constant 2 : index
    %c0_181 = arith.constant 0 : index
    %c0_182 = arith.constant 0 : index
    %313 = vector.load %arg18[%c2_180, %c0_181, %c0_182] : memref<3x1x32xf32, #tpu.memory_space<vmem>>, vector<1x1x32xf32>
    %314 = vector.shape_cast %313 : vector<1x1x32xf32> to vector<1x32xf32>
    %c2_183 = arith.constant 2 : index
    %c0_184 = arith.constant 0 : index
    %c0_185 = arith.constant 0 : index
    %315 = vector.load %arg19[%c2_183, %c0_184, %c0_185] : memref<3x1x32xf32, #tpu.memory_space<vmem>>, vector<1x1x32xf32>
    %316 = vector.shape_cast %315 : vector<1x1x32xf32> to vector<1x32xf32>
    %cst_186 = arith.constant dense<0.000000e+00> : vector<2xf32>
    %317 = vector.multi_reduction <add>, %312, %cst_186 [1] : vector<2x32xf32> to vector<2xf32>
    %318 = vector.shape_cast %317 : vector<2xf32> to vector<2x1xf32>
    %cst_187 = arith.constant 3.125000e-02 : f32
    %319 = vector.broadcast %cst_187 : f32 to vector<2x1xf32>
    %320 = arith.mulf %318, %319 : vector<2x1xf32>
    %321 = arith.mulf %312, %312 : vector<2x32xf32>
    %cst_188 = arith.constant dense<0.000000e+00> : vector<2xf32>
    %322 = vector.multi_reduction <add>, %321, %cst_188 [1] : vector<2x32xf32> to vector<2xf32>
    %323 = vector.shape_cast %322 : vector<2xf32> to vector<2x1xf32>
    %cst_189 = arith.constant 3.125000e-02 : f32
    %324 = vector.broadcast %cst_189 : f32 to vector<2x1xf32>
    %325 = arith.mulf %323, %324 : vector<2x1xf32>
    %326 = arith.mulf %320, %320 : vector<2x1xf32>
    %327 = arith.subf %325, %326 : vector<2x1xf32>
    %328 = vector.broadcast %320 : vector<2x1xf32> to vector<2x32xf32>
    %329 = arith.subf %312, %328 : vector<2x32xf32>
    %cst_190 = arith.constant 9.99999974E-6 : f32
    %330 = vector.broadcast %cst_190 : f32 to vector<2x1xf32>
    %331 = arith.addf %327, %330 : vector<2x1xf32>
    %332 = math.rsqrt %331 : vector<2x1xf32>
    %333 = vector.broadcast %332 : vector<2x1xf32> to vector<2x32xf32>
    %334 = arith.mulf %329, %333 : vector<2x32xf32>
    %335 = vector.broadcast %314 : vector<1x32xf32> to vector<2x32xf32>
    %336 = arith.mulf %334, %335 : vector<2x32xf32>
    %337 = vector.broadcast %316 : vector<1x32xf32> to vector<2x32xf32>
    %338 = arith.addf %336, %337 : vector<2x32xf32>
    %c0_191 = arith.constant 0 : index
    %c0_192 = arith.constant 0 : index
    %339 = vector.load %arg20[%c0_191, %c0_192] : memref<32x128xf32, #tpu.memory_space<vmem>>, vector<32x128xf32>
    %cst_193 = arith.constant dense<0.000000e+00> : vector<2x128xf32>
    %340 = tpu.matmul %338, %339, %cst_193 {dimension_numbers = #tpu.dot_dimension_numbers<[1], [0], [0], [1], [0, 0, 1, 1], [], []>} : vector<2x32xf32>, vector<32x128xf32>, vector<2x128xf32> -> vector<2x128xf32>
    %c0_194 = arith.constant 0 : index
    %c0_195 = arith.constant 0 : index
    %341 = vector.load %arg21[%c0_194, %c0_195] : memref<1x128xf32, #tpu.memory_space<vmem>>, vector<1x128xf32>
    %342 = vector.broadcast %341 : vector<1x128xf32> to vector<2x128xf32>
    %343 = arith.addf %340, %342 : vector<2x128xf32>
    %c0_196 = arith.constant 0 : index
    %c0_197 = arith.constant 0 : index
    %344 = vector.load %arg23[%c0_196, %c0_197] : memref<2x128xf32, #tpu.memory_space<vmem>>, vector<2x128xf32>
    tpu.vector_store %arg23[%c0_196, %c0_197], %343 {strides = array<i32>} : memref<2x128xf32, #tpu.memory_space<vmem>>, vector<2x128xf32>,
    return
  }
}

</mosaic_0001>

<llo_original>
// kernel: composite_attribute_analyzer.1
$region0: #{composite_attribute_analyzer.1}
  #allocation0 [shape = 'u32[]', space=smem, size = 0x4, offset = 0x4, fixed_abs, tag = 'smem constant byte address 0x4 - core index']
  #allocation1 [shape = 'u32[144,128]{1,0:T(1,128)}', space=vmem, size = 0x12000, scoped, tag = 'internal scratch']
  %s0 = inlined_call_operand.vmem [shape: f32[2,4,256], index: 0, kind: input, shape index: {}]
  %s1 = inlined_call_operand.vmem [shape: f32[4,64], index: 1, kind: input, shape index: {}]
  %s2 = inlined_call_operand.vmem [shape: f32[1,64], index: 2, kind: input, shape index: {}]
  %s3 = inlined_call_operand.vmem [shape: f32[64,32], index: 3, kind: input, shape index: {}]
  %s4 = inlined_call_operand.vmem [shape: f32[1,32], index: 4, kind: input, shape index: {}]
  %s5 = inlined_call_operand.vmem [shape: f32[32,128], index: 5, kind: input, shape index: {}]
  %s6 = inlined_call_operand.vmem [shape: f32[1,128], index: 6, kind: input, shape index: {}]
  %s7 = inlined_call_operand.vmem [shape: f32[128,32], index: 7, kind: input, shape index: {}]
  %s8 = inlined_call_operand.vmem [shape: f32[3,32,32], index: 8, kind: input, shape index: {}]
  %s9 = inlined_call_operand.vmem [shape: f32[3,1,32], index: 9, kind: input, shape index: {}]
  %s10 = inlined_call_operand.vmem [shape: f32[3,32,32], index: 10, kind: input, shape index: {}]
  %s11 = inlined_call_operand.vmem [shape: f32[3,1,32], index: 11, kind: input, shape index: {}]
  %s12 = inlined_call_operand.vmem [shape: f32[3,1,32], index: 12, kind: input, shape index: {}]
  %s13 = inlined_call_operand.vmem [shape: f32[3,1,32], index: 13, kind: input, shape index: {}]
  %s14 = inlined_call_operand.vmem [shape: f32[3,32,128], index: 14, kind: input, shape index: {}]
  %s15 = inlined_call_operand.vmem [shape: f32[3,1,128], index: 15, kind: input, shape index: {}]
  %s16 = inlined_call_operand.vmem [shape: f32[3,128,32], index: 16, kind: input, shape index: {}]
  %s17 = inlined_call_operand.vmem [shape: f32[3,1,32], index: 17, kind: input, shape index: {}]
  %s18 = inlined_call_operand.vmem [shape: f32[3,1,32], index: 18, kind: input, shape index: {}]
  %s19 = inlined_call_operand.vmem [shape: f32[3,1,32], index: 19, kind: input, shape index: {}]
  %s20 = inlined_call_operand.vmem [shape: f32[32,128], index: 20, kind: input, shape index: {}]
  %s21 = inlined_call_operand.vmem [shape: f32[1,128], index: 21, kind: input, shape index: {}]
  %s22 = inlined_call_operand.hbm [shape: f32[2,128], index: 22, kind: output, shape index: {0}]
  %s23 = inlined_call_operand.hbm [shape: f32[2,128], index: 23, kind: output, shape index: {1}]
  %24 = xla_tuple %s22, %s23
  %s25 = sld [smem:[#allocation0]]
  $region106: #{composite_attribute_analyzer.1} parent=0
    _
  %s27 = ssub.s32 1, %s25
  %s28 = scalar_select 0, %s27, %s25
  $region1: #{composite_attribute_analyzer.1} parent=0
    #allocation2 [shape = 'u8[1024]{0}', space=vmem, size = 0x400, scoped, tag = 'output window, operand 0, single buffered']
    #allocation3 [shape = 's32[1]{0}', space=sflag, size = 0x4, scoped, tag = 'scoped memory for composite_attribute_analyzer.1']
    #allocation4 [shape = 'u8[1024]{0}', space=vmem, size = 0x400, scoped, tag = 'output window, operand 1, single buffered']
    #allocation5 [shape = 's32[1]{0}', space=sflag, size = 0x4, scoped, tag = 'scoped memory for composite_attribute_analyzer.1']
    %29 = vsyncpa [#allocation3], 0
    %30 = vsyncpa [#allocation5], 0
    // Predicated region
    $region2: #{composite_attribute_analyzer.1} parent=1 // pred_check
      _
    $region3: #{composite_attribute_analyzer.1} parent=1 // pred_check_branch
      %32 = sbr.rel (0) target = $region5
    $region4: #{composite_attribute_analyzer.1} parent=1 // pred_region
      _
    $region5: #{composite_attribute_analyzer.1} parent=1 // pred_fallthru
      _
    // Predicated region
    $region6: #{composite_attribute_analyzer.1} parent=1 // pred_check
      _
    $region7: #{composite_attribute_analyzer.1} parent=1 // pred_check_branch
      %34 = sbr.rel (0) target = $region9
    $region8: #{composite_attribute_analyzer.1} parent=1 // pred_region
      _
    $region9: #{composite_attribute_analyzer.1} parent=1 // pred_fallthru
      _
    // Predicated region
    $region10: #{composite_attribute_analyzer.1} parent=1 // pred_check
      _
    $region11: #{composite_attribute_analyzer.1} parent=1 // pred_check_branch
      %36 = sbr.rel (0) target = $region13
    $region12: #{composite_attribute_analyzer.1} parent=1 // pred_region
      _
    $region13: #{composite_attribute_analyzer.1} parent=1 // pred_fallthru
      _
    // Predicated region
    $region14: #{composite_attribute_analyzer.1} parent=1 // pred_check
      _
    $region15: #{composite_attribute_analyzer.1} parent=1 // pred_check_branch
      %38 = sbr.rel (0) target = $region17
    $region16: #{composite_attribute_analyzer.1} parent=1 // pred_region
      _
    $region17: #{composite_attribute_analyzer.1} parent=1 // pred_fallthru
      _
    // Predicated region
    $region18: #{composite_attribute_analyzer.1} parent=1 // pred_check
      _
    $region19: #{composite_attribute_analyzer.1} parent=1 // pred_check_branch
      %40 = sbr.rel (0) target = $region21
    $region20: #{composite_attribute_analyzer.1} parent=1 // pred_region
      _
    $region21: #{composite_attribute_analyzer.1} parent=1 // pred_fallthru
      _
    // Predicated region
    $region22: #{composite_attribute_analyzer.1} parent=1 // pred_check
      _
    $region23: #{composite_attribute_analyzer.1} parent=1 // pred_check_branch
      %42 = sbr.rel (0) target = $region25
    $region24: #{composite_attribute_analyzer.1} parent=1 // pred_region
      _
    $region25: #{composite_attribute_analyzer.1} parent=1 // pred_fallthru
      _
    // Predicated region
    $region26: #{composite_attribute_analyzer.1} parent=1 // pred_check
      _
    $region27: #{composite_attribute_analyzer.1} parent=1 // pred_check_branch
      %44 = sbr.rel (0) target = $region29
    $region28: #{composite_attribute_analyzer.1} parent=1 // pred_region
      _
    $region29: #{composite_attribute_analyzer.1} parent=1 // pred_fallthru
      _
    // Predicated region
    $region30: #{composite_attribute_analyzer.1} parent=1 // pred_check
      _
    $region31: #{composite_attribute_analyzer.1} parent=1 // pred_check_branch
      %46 = sbr.rel (0) target = $region33
    $region32: #{composite_attribute_analyzer.1} parent=1 // pred_region
      _
    $region33: #{composite_attribute_analyzer.1} parent=1 // pred_fallthru
      _
    // Predicated region
    $region34: #{composite_attribute_analyzer.1} parent=1 // pred_check
      _
    $region35: #{composite_attribute_analyzer.1} parent=1 // pred_check_branch
      %48 = sbr.rel (0) target = $region37
    $region36: #{composite_attribute_analyzer.1} parent=1 // pred_region
      _
    $region37: #{composite_attribute_analyzer.1} parent=1 // pred_fallthru
      _
    // Predicated region
    $region38: #{composite_attribute_analyzer.1} parent=1 // pred_check
      _
    $region39: #{composite_attribute_analyzer.1} parent=1 // pred_check_branch
      %50 = sbr.rel (0) target = $region41
    $region40: #{composite_attribute_analyzer.1} parent=1 // pred_region
      _
    $region41: #{composite_attribute_analyzer.1} parent=1 // pred_fallthru
      _
    // Predicated region
    $region42: #{composite_attribute_analyzer.1} parent=1 // pred_check
      _
    $region43: #{composite_attribute_analyzer.1} parent=1 // pred_check_branch
      %52 = sbr.rel (0) target = $region45
    $region44: #{composite_attribute_analyzer.1} parent=1 // pred_region
      _
    $region45: #{composite_attribute_analyzer.1} parent=1 // pred_fallthru
      _
    // Predicated region
    $region46: #{composite_attribute_analyzer.1} parent=1 // pred_check
      _
    $region47: #{composite_attribute_analyzer.1} parent=1 // pred_check_branch
      %54 = sbr.rel (0) target = $region49
    $region48: #{composite_attribute_analyzer.1} parent=1 // pred_region
      _
    $region49: #{composite_attribute_analyzer.1} parent=1 // pred_fallthru
      _
    // Predicated region
    $region50: #{composite_attribute_analyzer.1} parent=1 // pred_check
      _
    $region51: #{composite_attribute_analyzer.1} parent=1 // pred_check_branch
      %56 = sbr.rel (0) target = $region53
    $region52: #{composite_attribute_analyzer.1} parent=1 // pred_region
      _
    $region53: #{composite_attribute_analyzer.1} parent=1 // pred_fallthru
      _
    // Predicated region
    $region54: #{composite_attribute_analyzer.1} parent=1 // pred_check
      _
    $region55: #{composite_attribute_analyzer.1} parent=1 // pred_check_branch
      %58 = sbr.rel (0) target = $region57
    $region56: #{composite_attribute_analyzer.1} parent=1 // pred_region
      _
    $region57: #{composite_attribute_analyzer.1} parent=1 // pred_fallthru
      _
    // Predicated region
    $region58: #{composite_attribute_analyzer.1} parent=1 // pred_check
      _
    $region59: #{composite_attribute_analyzer.1} parent=1 // pred_check_branch
      %60 = sbr.rel (0) target = $region61
    $region60: #{composite_attribute_analyzer.1} parent=1 // pred_region
      _
    $region61: #{composite_attribute_analyzer.1} parent=1 // pred_fallthru
      _
    // Predicated region
    $region62: #{composite_attribute_analyzer.1} parent=1 // pred_check
      _
    $region63: #{composite_attribute_analyzer.1} parent=1 // pred_check_branch
      %62 = sbr.rel (0) target = $region65
    $region64: #{composite_attribute_analyzer.1} parent=1 // pred_region
      _
    $region65: #{composite_attribute_analyzer.1} parent=1 // pred_fallthru
      _
    // Predicated region
    $region66: #{composite_attribute_analyzer.1} parent=1 // pred_check
      _
    $region67: #{composite_attribute_analyzer.1} parent=1 // pred_check_branch
      %64 = sbr.rel (0) target = $region69
    $region68: #{composite_attribute_analyzer.1} parent=1 // pred_region
      _
    $region69: #{composite_attribute_analyzer.1} parent=1 // pred_fallthru
      _
    // Predicated region
    $region70: #{composite_attribute_analyzer.1} parent=1 // pred_check
      _
    $region71: #{composite_attribute_analyzer.1} parent=1 // pred_check_branch
      %66 = sbr.rel (0) target = $region73
    $region72: #{composite_attribute_analyzer.1} parent=1 // pred_region
      _
    $region73: #{composite_attribute_analyzer.1} parent=1 // pred_fallthru
      _
    // Predicated region
    $region74: #{composite_attribute_analyzer.1} parent=1 // pred_check
      _
    $region75: #{composite_attribute_analyzer.1} parent=1 // pred_check_branch
      %68 = sbr.rel (0) target = $region77
    $region76: #{composite_attribute_analyzer.1} parent=1 // pred_region
      _
    $region77: #{composite_attribute_analyzer.1} parent=1 // pred_fallthru
      _
    // Predicated region
    $region78: #{composite_attribute_analyzer.1} parent=1 // pred_check
      _
    $region79: #{composite_attribute_analyzer.1} parent=1 // pred_check_branch
      %70 = sbr.rel (0) target = $region81
    $region80: #{composite_attribute_analyzer.1} parent=1 // pred_region
      _
    $region81: #{composite_attribute_analyzer.1} parent=1 // pred_fallthru
      _
    // Predicated region
    $region82: #{composite_attribute_analyzer.1} parent=1 // pred_check
      _
    $region83: #{composite_attribute_analyzer.1} parent=1 // pred_check_branch
      %72 = sbr.rel (0) target = $region85
    $region84: #{composite_attribute_analyzer.1} parent=1 // pred_region
      _
    $region85: #{composite_attribute_analyzer.1} parent=1 // pred_fallthru
      _
    // Predicated region
    $region86: #{composite_attribute_analyzer.1} parent=1 // pred_check
      _
    $region87: #{composite_attribute_analyzer.1} parent=1 // pred_check_branch
      %74 = sbr.rel (0) target = $region89
    $region88: #{composite_attribute_analyzer.1} parent=1 // pred_region
      _
    $region89: #{composite_attribute_analyzer.1} parent=1 // pred_fallthru
      _
    %v75 = vld [vmem:[%s0] sm:$0xff]
    %v76 = vld [vmem:[%s0 + $0x8] sm:$0xff]
    %v79 = vcombine.high %v75, %v75
    %v80 = vcombine.high %v76, %v76
    %vm83 = vcmask 1043456
    %v84 = vsel %vm83, %v75, 0.0
    %v85 = vsel %vm83, %v79, 0.0
    %v86 = vadd.f32 %v84, %v85
    %87 = vadd.xlane.f32.xlu0 %v86
    %v88 = vpop.xlane.xlu0 %87
    %v89 = vsel %vm83, %v76, 0.0
    %v90 = vsel %vm83, %v80, 0.0
    %v91 = vadd.f32 %v89, %v90
    %92 = vadd.xlane.f32.xlu0 %v91
    %v93 = vpop.xlane.xlu0 %92
    %v94 = vrcp.pop 256.0
    %v95 = vmul.f32 %v88, %v94
    %v96 = vmul.f32 %v93, %v94
    %v97 = vld [vmem:[%s1] sm:$0x1]
    %v98 = vlaneseq
    %v99 = vshrl.u32 %v98, 7
    %v100 = vsub.s32 0, %v99
    %v101 = vrot.slane %v95, %v100
    %v102 = vlaneseq
    %v103 = vshrl.u32 %v102, 7
    %v104 = vsub.s32 0, %v103
    %v105 = vrot.slane %v96, %v104
    %v106 = vlaneseq
    %v107 = vshrl.u32 %v106, 7
    %v108 = vsub.s32 0, %v107
    %v109 = vrot.slane %v97, %v108
    %112 = vbcast.lane.b32.xlu0 %v109, 256
    %v113 = vpop.permute.xlu0 %112
    %s115 = sor.u32 256, 8
    %116 = vbcast.lane.b32.xlu0 %v109, %s115
    %v117 = vpop.permute.xlu0 %116
    %s119 = sor.u32 256, 16
    %120 = vbcast.lane.b32.xlu0 %v109, %s119
    %v121 = vpop.permute.xlu0 %120
    %s123 = sor.u32 256, 24
    %124 = vbcast.lane.b32.xlu0 %v109, %s123
    %v125 = vpop.permute.xlu0 %124
    %s127 = sor.u32 256, 32
    %128 = vbcast.lane.b32.xlu0 %v109, %s127
    %v129 = vpop.permute.xlu0 %128
    %s131 = sor.u32 256, 40
    %132 = vbcast.lane.b32.xlu0 %v109, %s131
    %v133 = vpop.permute.xlu0 %132
    %s135 = sor.u32 256, 48
    %136 = vbcast.lane.b32.xlu0 %v109, %s135
    %v137 = vpop.permute.xlu0 %136
    %s139 = sor.u32 256, 56
    %140 = vbcast.lane.b32.xlu0 %v109, %s139
    %v141 = vpop.permute.xlu0 %140
    %v150 = vmul.f32 %v101, %v113
    %v151 = vmul.f32 %v101, %v117
    %v152 = vmul.f32 %v101, %v121
    %v153 = vmul.f32 %v101, %v125
    %v154 = vmul.f32 %v101, %v129
    %v155 = vmul.f32 %v101, %v133
    %v156 = vmul.f32 %v101, %v137
    %v157 = vmul.f32 %v101, %v141
    %v158 = vmul.f32 %v105, %v113
    %v159 = vmul.f32 %v105, %v117
    %v160 = vmul.f32 %v105, %v121
    %v161 = vmul.f32 %v105, %v125
    %v162 = vmul.f32 %v105, %v129
    %v163 = vmul.f32 %v105, %v133
    %v164 = vmul.f32 %v105, %v137
    %v165 = vmul.f32 %v105, %v141
    %v166 = vadd.f32 %v150, 0.0
    %v167 = vadd.f32 %v151, 0.0
    %v168 = vadd.f32 %v152, 0.0
    %v169 = vadd.f32 %v153, 0.0
    %v170 = vadd.f32 %v154, 0.0
    %v171 = vadd.f32 %v155, 0.0
    %v172 = vadd.f32 %v156, 0.0
    %v173 = vadd.f32 %v157, 0.0
    %v174 = vadd.f32 %v158, 0.0
    %v175 = vadd.f32 %v159, 0.0
    %v176 = vadd.f32 %v160, 0.0
    %v177 = vadd.f32 %v161, 0.0
    %v178 = vadd.f32 %v162, 0.0
    %v179 = vadd.f32 %v163, 0.0
    %v180 = vadd.f32 %v164, 0.0
    %v181 = vadd.f32 %v165, 0.0
    %v182 = vld [vmem:[%s1 + $0x1] sm:$0x1]
    %v183 = vlaneseq
    %v184 = vshrl.u32 %v183, 7
    %v185 = vsub.s32 1, %v184
    %v186 = vrot.slane %v95, %v185
    %v187 = vlaneseq
    %v188 = vshrl.u32 %v187, 7
    %v189 = vsub.s32 1, %v188
    %v190 = vrot.slane %v96, %v189
    %v191 = vlaneseq
    %v192 = vshrl.u32 %v191, 7
    %v193 = vsub.s32 0, %v192
    %v194 = vrot.slane %v182, %v193
    %197 = vbcast.lane.b32.xlu0 %v194, 256
    %v198 = vpop.permute.xlu0 %197
    %s200 = sor.u32 256, 8
    %201 = vbcast.lane.b32.xlu0 %v194, %s200
    %v202 = vpop.permute.xlu0 %201
    %s204 = sor.u32 256, 16
    %205 = vbcast.lane.b32.xlu0 %v194, %s204
    %v206 = vpop.permute.xlu0 %205
    %s208 = sor.u32 256, 24
    %209 = vbcast.lane.b32.xlu0 %v194, %s208
    %v210 = vpop.permute.xlu0 %209
    %s212 = sor.u32 256, 32
    %213 = vbcast.lane.b32.xlu0 %v194, %s212
    %v214 = vpop.permute.xlu0 %213
    %s216 = sor.u32 256, 40
    %217 = vbcast.lane.b32.xlu0 %v194, %s216
    %v218 = vpop.permute.xlu0 %217
    %s220 = sor.u32 256, 48
    %221 = vbcast.lane.b32.xlu0 %v194, %s220
    %v222 = vpop.permute.xlu0 %221
    %s224 = sor.u32 256, 56
    %225 = vbcast.lane.b32.xlu0 %v194, %s224
    %v226 = vpop.permute.xlu0 %225
    %v235 = vmul.f32 %v186, %v198
    %v236 = vmul.f32 %v186, %v202
    %v237 = vmul.f32 %v186, %v206
    %v238 = vmul.f32 %v186, %v210
    %v239 = vmul.f32 %v186, %v214
    %v240 = vmul.f32 %v186, %v218
    %v241 = vmul.f32 %v186, %v222
    %v242 = vmul.f32 %v186, %v226
    %v243 = vmul.f32 %v190, %v198
    %v244 = vmul.f32 %v190, %v202
    %v245 = vmul.f32 %v190, %v206
    %v246 = vmul.f32 %v190, %v210
    %v247 = vmul.f32 %v190, %v214
    %v248 = vmul.f32 %v190, %v218
    %v249 = vmul.f32 %v190, %v222
    %v250 = vmul.f32 %v190, %v226
    %v251 = vadd.f32 %v166, %v235
    %v252 = vadd.f32 %v167, %v236
    %v253 = vadd.f32 %v168, %v237
    %v254 = vadd.f32 %v169, %v238
    %v255 = vadd.f32 %v170, %v239
    %v256 = vadd.f32 %v171, %v240
    %v257 = vadd.f32 %v172, %v241
    %v258 = vadd.f32 %v173, %v242
    %v259 = vadd.f32 %v174, %v243
    %v260 = vadd.f32 %v175, %v244
    %v261 = vadd.f32 %v176, %v245
    %v262 = vadd.f32 %v177, %v246
    %v263 = vadd.f32 %v178, %v247
    %v264 = vadd.f32 %v179, %v248
    %v265 = vadd.f32 %v180, %v249
    %v266 = vadd.f32 %v181, %v250
    %v267 = vld [vmem:[%s1 + $0x2] sm:$0x1]
    %v268 = vlaneseq
    %v269 = vshrl.u32 %v268, 7
    %v270 = vsub.s32 2, %v269
    %v271 = vrot.slane %v95, %v270
    %v272 = vlaneseq
    %v273 = vshrl.u32 %v272, 7
    %v274 = vsub.s32 2, %v273
    %v275 = vrot.slane %v96, %v274
    %v276 = vlaneseq
    %v277 = vshrl.u32 %v276, 7
    %v278 = vsub.s32 0, %v277
    %v279 = vrot.slane %v267, %v278
    %282 = vbcast.lane.b32.xlu0 %v279, 256
    %v283 = vpop.permute.xlu0 %282
    %s285 = sor.u32 256, 8
    %286 = vbcast.lane.b32.xlu0 %v279, %s285
    %v287 = vpop.permute.xlu0 %286
    %s289 = sor.u32 256, 16
    %290 = vbcast.lane.b32.xlu0 %v279, %s289
    %v291 = vpop.permute.xlu0 %290
    %s293 = sor.u32 256, 24
    %294 = vbcast.lane.b32.xlu0 %v279, %s293
    %v295 = vpop.permute.xlu0 %294
    %s297 = sor.u32 256, 32
    %298 = vbcast.lane.b32.xlu0 %v279, %s297
    %v299 = vpop.permute.xlu0 %298
    %s301 = sor.u32 256, 40
    %302 = vbcast.lane.b32.xlu0 %v279, %s301
    %v303 = vpop.permute.xlu0 %302
    %s305 = sor.u32 256, 48
    %306 = vbcast.lane.b32.xlu0 %v279, %s305
    %v307 = vpop.permute.xlu0 %306
    %s309 = sor.u32 256, 56
    %310 = vbcast.lane.b32.xlu0 %v279, %s309
    %v311 = vpop.permute.xlu0 %310
    %v320 = vmul.f32 %v271, %v283
    %v321 = vmul.f32 %v271, %v287
    %v322 = vmul.f32 %v271, %v291
    %v323 = vmul.f32 %v271, %v295
    %v324 = vmul.f32 %v271, %v299
    %v325 = vmul.f32 %v271, %v303
    %v326 = vmul.f32 %v271, %v307
    %v327 = vmul.f32 %v271, %v311
    %v328 = vmul.f32 %v275, %v283
    %v329 = vmul.f32 %v275, %v287
    %v330 = vmul.f32 %v275, %v291
    %v331 = vmul.f32 %v275, %v295
    %v332 = vmul.f32 %v275, %v299
    %v333 = vmul.f32 %v275, %v303
    %v334 = vmul.f32 %v275, %v307
    %v335 = vmul.f32 %v275, %v311
    %v336 = vadd.f32 %v251, %v320
    %v337 = vadd.f32 %v252, %v321
    %v338 = vadd.f32 %v253, %v322
    %v339 = vadd.f32 %v254, %v323
    %v340 = vadd.f32 %v255, %v324
    %v341 = vadd.f32 %v256, %v325
    %v342 = vadd.f32 %v257, %v326
    %v343 = vadd.f32 %v258, %v327
    %v344 = vadd.f32 %v259, %v328
    %v345 = vadd.f32 %v260, %v329
    %v346 = vadd.f32 %v261, %v330
    %v347 = vadd.f32 %v262, %v331
    %v348 = vadd.f32 %v263, %v332
    %v349 = vadd.f32 %v264, %v333
    %v350 = vadd.f32 %v265, %v334
    %v351 = vadd.f32 %v266, %v335
    %v352 = vld [vmem:[%s1 + $0x3] sm:$0x1]
    %v353 = vlaneseq
    %v354 = vshrl.u32 %v353, 7
    %v355 = vsub.s32 3, %v354
    %v356 = vrot.slane %v95, %v355
    %v357 = vlaneseq
    %v358 = vshrl.u32 %v357, 7
    %v359 = vsub.s32 3, %v358
    %v360 = vrot.slane %v96, %v359
    %v361 = vlaneseq
    %v362 = vshrl.u32 %v361, 7
    %v363 = vsub.s32 0, %v362
    %v364 = vrot.slane %v352, %v363
    %367 = vbcast.lane.b32.xlu0 %v364, 256
    %v368 = vpop.permute.xlu0 %367
    %s370 = sor.u32 256, 8
    %371 = vbcast.lane.b32.xlu0 %v364, %s370
    %v372 = vpop.permute.xlu0 %371
    %s374 = sor.u32 256, 16
    %375 = vbcast.lane.b32.xlu0 %v364, %s374
    %v376 = vpop.permute.xlu0 %375
    %s378 = sor.u32 256, 24
    %379 = vbcast.lane.b32.xlu0 %v364, %s378
    %v380 = vpop.permute.xlu0 %379
    %s382 = sor.u32 256, 32
    %383 = vbcast.lane.b32.xlu0 %v364, %s382
    %v384 = vpop.permute.xlu0 %383
    %s386 = sor.u32 256, 40
    %387 = vbcast.lane.b32.xlu0 %v364, %s386
    %v388 = vpop.permute.xlu0 %387
    %s390 = sor.u32 256, 48
    %391 = vbcast.lane.b32.xlu0 %v364, %s390
    %v392 = vpop.permute.xlu0 %391
    %s394 = sor.u32 256, 56
    %395 = vbcast.lane.b32.xlu0 %v364, %s394
    %v396 = vpop.permute.xlu0 %395
    %v405 = vmul.f32 %v356, %v368
    %v406 = vmul.f32 %v356, %v372
    %v407 = vmul.f32 %v356, %v376
    %v408 = vmul.f32 %v356, %v380
    %v409 = vmul.f32 %v356, %v384
    %v410 = vmul.f32 %v356, %v388
    %v411 = vmul.f32 %v356, %v392
    %v412 = vmul.f32 %v356, %v396
    %v413 = vmul.f32 %v360, %v368
    %v414 = vmul.f32 %v360, %v372
    %v415 = vmul.f32 %v360, %v376
    %v416 = vmul.f32 %v360, %v380
    %v417 = vmul.f32 %v360, %v384
    %v418 = vmul.f32 %v360, %v388
    %v419 = vmul.f32 %v360, %v392
    %v420 = vmul.f32 %v360, %v396
    %v421 = vadd.f32 %v336, %v405
    %v422 = vadd.f32 %v337, %v406
    %v423 = vadd.f32 %v338, %v407
    %v424 = vadd.f32 %v339, %v408
    %v425 = vadd.f32 %v340, %v409
    %v426 = vadd.f32 %v341, %v410
    %v427 = vadd.f32 %v342, %v411
    %v428 = vadd.f32 %v343, %v412
    %v429 = vadd.f32 %v344, %v413
    %v430 = vadd.f32 %v345, %v414
    %v431 = vadd.f32 %v346, %v415
    %v432 = vadd.f32 %v347, %v416
    %v433 = vadd.f32 %v348, %v417
    %v434 = vadd.f32 %v349, %v418
    %v435 = vadd.f32 %v350, %v419
    %v436 = vadd.f32 %v351, %v420
    %v437 = vld [vmem:[%s2] sm:$0x1]
    %v439 = vlaneseq
    %v440 = vshrl.u32 %v439, 7
    %v441 = vsub.s32 0, %v440
    %v442 = vrot.slane %v437, %v441
    %444 = vbcast.lane.b32.xlu0 %v442, 256
    %v445 = vpop.permute.xlu0 %444
    %s447 = sor.u32 256, 8
    %448 = vbcast.lane.b32.xlu0 %v442, %s447
    %v449 = vpop.permute.xlu0 %448
    %s451 = sor.u32 256, 16
    %452 = vbcast.lane.b32.xlu0 %v442, %s451
    %v453 = vpop.permute.xlu0 %452
    %s455 = sor.u32 256, 24
    %456 = vbcast.lane.b32.xlu0 %v442, %s455
    %v457 = vpop.permute.xlu0 %456
    %s459 = sor.u32 256, 32
    %460 = vbcast.lane.b32.xlu0 %v442, %s459
    %v461 = vpop.permute.xlu0 %460
    %s463 = sor.u32 256, 40
    %464 = vbcast.lane.b32.xlu0 %v442, %s463
    %v465 = vpop.permute.xlu0 %464
    %s467 = sor.u32 256, 48
    %468 = vbcast.lane.b32.xlu0 %v442, %s467
    %v469 = vpop.permute.xlu0 %468
    %s471 = sor.u32 256, 56
    %472 = vbcast.lane.b32.xlu0 %v442, %s471
    %v473 = vpop.permute.xlu0 %472
    %v482 = vadd.f32 %v421, %v445
    %v483 = vadd.f32 %v422, %v449
    %v484 = vadd.f32 %v423, %v453
    %v485 = vadd.f32 %v424, %v457
    %v486 = vadd.f32 %v425, %v461
    %v487 = vadd.f32 %v426, %v465
    %v488 = vadd.f32 %v427, %v469
    %v489 = vadd.f32 %v428, %v473
    %v490 = vadd.f32 %v429, %v445
    %v491 = vadd.f32 %v430, %v449
    %v492 = vadd.f32 %v431, %v453
    %v493 = vadd.f32 %v432, %v457
    %v494 = vadd.f32 %v433, %v461
    %v495 = vadd.f32 %v434, %v465
    %v496 = vadd.f32 %v435, %v469
    %v497 = vadd.f32 %v436, %v473
    %v498 = vmax.f32 %v482, 0.0
    %v499 = vmax.f32 %v483, 0.0
    %v500 = vmax.f32 %v484, 0.0
    %v501 = vmax.f32 %v485, 0.0
    %v502 = vmax.f32 %v486, 0.0
    %v503 = vmax.f32 %v487, 0.0
    %v504 = vmax.f32 %v488, 0.0
    %v505 = vmax.f32 %v489, 0.0
    %v506 = vmax.f32 %v490, 0.0
    %v507 = vmax.f32 %v491, 0.0
    %v508 = vmax.f32 %v492, 0.0
    %v509 = vmax.f32 %v493, 0.0
    %v510 = vmax.f32 %v494, 0.0
    %v511 = vmax.f32 %v495, 0.0
    %v512 = vmax.f32 %v496, 0.0
    %v513 = vmax.f32 %v497, 0.0
    %v514 = vld [vmem:[%s3] sm:$0xff]
    %v515 = vld [vmem:[%s3 + $0x8] sm:$0xff]
    %v516 = vld [vmem:[%s3 + $0x10] sm:$0xff]
    %v517 = vld [vmem:[%s3 + $0x18] sm:$0xff]
    %v518 = vld [vmem:[%s3 + $0x20] sm:$0xff]
    %v519 = vld [vmem:[%s3 + $0x28] sm:$0xff]
    %v520 = vld [vmem:[%s3 + $0x30] sm:$0xff]
    %v521 = vld [vmem:[%s3 + $0x38] sm:$0xff]
    %v522 = vld [vmem:[%s4] sm:$0x1]
    %v524 = vlaneseq
    %v525 = vshrl.u32 %v524, 7
    %v526 = vsub.s32 0, %v525
    %v527 = vrot.slane %v522, %v526
    %545 = vset.pattern.permute.xlu0 0
    %546 = vperm.xlu0 %545, %v498
    %v547 = vpop.permute.xlu0 %546
    %548 = vset.pattern.permute.xlu0 0
    %549 = vperm.xlu0 %548, %v499
    %v550 = vpop.permute.xlu0 %549
    %551 = vset.pattern.permute.xlu0 0
    %552 = vperm.xlu0 %551, %v500
    %v553 = vpop.permute.xlu0 %552
    %554 = vset.pattern.permute.xlu0 0
    %555 = vperm.xlu0 %554, %v501
    %v556 = vpop.permute.xlu0 %555
    %557 = vset.pattern.permute.xlu0 0
    %558 = vperm.xlu0 %557, %v502
    %v559 = vpop.permute.xlu0 %558
    %560 = vset.pattern.permute.xlu0 0
    %561 = vperm.xlu0 %560, %v503
    %v562 = vpop.permute.xlu0 %561
    %563 = vset.pattern.permute.xlu0 0
    %564 = vperm.xlu0 %563, %v504
    %v565 = vpop.permute.xlu0 %564
    %566 = vset.pattern.permute.xlu0 0
    %567 = vperm.xlu0 %566, %v505
    %v568 = vpop.permute.xlu0 %567
    %569 = vset.pattern.permute.xlu0 0
    %570 = vperm.xlu0 %569, %v506
    %v571 = vpop.permute.xlu0 %570
    %572 = vset.pattern.permute.xlu0 0
    %573 = vperm.xlu0 %572, %v507
    %v574 = vpop.permute.xlu0 %573
    %575 = vset.pattern.permute.xlu0 0
    %576 = vperm.xlu0 %575, %v508
    %v577 = vpop.permute.xlu0 %576
    %578 = vset.pattern.permute.xlu0 0
    %579 = vperm.xlu0 %578, %v509
    %v580 = vpop.permute.xlu0 %579
    %581 = vset.pattern.permute.xlu0 0
    %582 = vperm.xlu0 %581, %v510
    %v583 = vpop.permute.xlu0 %582
    %584 = vset.pattern.permute.xlu0 0
    %585 = vperm.xlu0 %584, %v511
    %v586 = vpop.permute.xlu0 %585
    %587 = vset.pattern.permute.xlu0 0
    %588 = vperm.xlu0 %587, %v512
    %v589 = vpop.permute.xlu0 %588
    %590 = vset.pattern.permute.xlu0 0
    %591 = vperm.xlu0 %590, %v513
    %v592 = vpop.permute.xlu0 %591
    %v593 = vlaneseq
    %v594 = vand.u32 %v593, 127
    %v595 = vlaneseq
    %v596 = vshrl.u32 %v595, 7
    %v597 = vsub.s32 %v594, %v596
    %v598 = vrot.slane %v547, %v597
    %v599 = vadd.s32 %v594, 4294967288
    %v600 = vlaneseq
    %v601 = vshrl.u32 %v600, 7
    %v602 = vsub.s32 %v599, %v601
    %v603 = vrot.slane %v550, %v602
    %vm604 = vcmask 130112
    %v605 = vsel %vm604, %v603, %v598
    %v606 = vadd.s32 %v594, 4294967280
    %v607 = vlaneseq
    %v608 = vshrl.u32 %v607, 7
    %v609 = vsub.s32 %v606, %v608
    %v610 = vrot.slane %v553, %v609
    %vm611 = vcmask 195712
    %v612 = vsel %vm611, %v610, %v605
    %v613 = vadd.s32 %v594, 4294967272
    %v614 = vlaneseq
    %v615 = vshrl.u32 %v614, 7
    %v616 = vsub.s32 %v613, %v615
    %v617 = vrot.slane %v556, %v616
    %vm618 = vcmask 261312
    %v619 = vsel %vm618, %v617, %v612
    %v620 = vadd.s32 %v594, 4294967264
    %v621 = vlaneseq
    %v622 = vshrl.u32 %v621, 7
    %v623 = vsub.s32 %v620, %v622
    %v624 = vrot.slane %v559, %v623
    %vm625 = vcmask 326912
    %v626 = vsel %vm625, %v624, %v619
    %v627 = vadd.s32 %v594, 4294967256
    %v628 = vlaneseq
    %v629 = vshrl.u32 %v628, 7
    %v630 = vsub.s32 %v627, %v629
    %v631 = vrot.slane %v562, %v630
    %vm632 = vcmask 392512
    %v633 = vsel %vm632, %v631, %v626
    %v634 = vadd.s32 %v594, 4294967248
    %v635 = vlaneseq
    %v636 = vshrl.u32 %v635, 7
    %v637 = vsub.s32 %v634, %v636
    %v638 = vrot.slane %v565, %v637
    %vm639 = vcmask 458112
    %v640 = vsel %vm639, %v638, %v633
    %v641 = vadd.s32 %v594, 4294967240
    %v642 = vlaneseq
    %v643 = vshrl.u32 %v642, 7
    %v644 = vsub.s32 %v641, %v643
    %v645 = vrot.slane %v568, %v644
    %vm646 = vcmask 523712
    %v647 = vsel %vm646, %v645, %v640
    %v648 = vlaneseq
    %v649 = vshrl.u32 %v648, 7
    %v650 = vsub.s32 %v594, %v649
    %v651 = vrot.slane %v571, %v650
    %v652 = vlaneseq
    %v653 = vshrl.u32 %v652, 7
    %v654 = vsub.s32 %v599, %v653
    %v655 = vrot.slane %v574, %v654
    %v656 = vsel %vm604, %v655, %v651
    %v657 = vlaneseq
    %v658 = vshrl.u32 %v657, 7
    %v659 = vsub.s32 %v606, %v658
    %v660 = vrot.slane %v577, %v659
    %v661 = vsel %vm611, %v660, %v656
    %v662 = vlaneseq
    %v663 = vshrl.u32 %v662, 7
    %v664 = vsub.s32 %v613, %v663
    %v665 = vrot.slane %v580, %v664
    %v666 = vsel %vm618, %v665, %v661
    %v667 = vlaneseq
    %v668 = vshrl.u32 %v667, 7
    %v669 = vsub.s32 %v620, %v668
    %v670 = vrot.slane %v583, %v669
    %v671 = vsel %vm625, %v670, %v666
    %v672 = vlaneseq
    %v673 = vshrl.u32 %v672, 7
    %v674 = vsub.s32 %v627, %v673
    %v675 = vrot.slane %v586, %v674
    %v676 = vsel %vm632, %v675, %v671
    %v677 = vlaneseq
    %v678 = vshrl.u32 %v677, 7
    %v679 = vsub.s32 %v634, %v678
    %v680 = vrot.slane %v589, %v679
    %v681 = vsel %vm639, %v680, %v676
    %v682 = vlaneseq
    %v683 = vshrl.u32 %v682, 7
    %v684 = vsub.s32 %v641, %v683
    %v685 = vrot.slane %v592, %v684
    %v686 = vsel %vm646, %v685, %v681
    %vm687 = vcmask 1041409
    %v688 = vsel %vm687, %v686, %v647
    %vm689 = vcmask 523264
    %v690 = vsel %vm689, %v688, 0
    %692 = vmatprep.subr.mxu0 0.0
    %693 = vmatpush1.msra.mxu0 %v514
    %694 = vmatprep.subr.mxu0 0.0
    %695 = vmatpush1.msra.mxu0 %v515
    %696 = vmatprep.subr.mxu0 0.0
    %697 = vmatpush1.msra.mxu0 %v516
    %698 = vmatprep.subr.mxu0 0.0
    %699 = vmatpush1.msra.mxu0 %v517
    %700 = vmatprep.subr.mxu0 0.0
    %701 = vmatpush1.msra.mxu0 %v518
    %702 = vmatprep.subr.mxu0 0.0
    %703 = vmatpush1.msra.mxu0 %v519
    %704 = vmatprep.subr.mxu0 0.0
    %705 = vmatpush1.msra.mxu0 %v520
    %706 = vmatprep.subr.mxu0 0.0
    %707 = vmatpush1.msra.mxu0 %v521
    %708 = vmatprep.subr.mxu0 0.0
    %709 = vmatpush1.msra.mxu0 0.0
    %710 = vmatprep.subr.mxu0 0.0
    %711 = vmatpush1.msra.mxu0 0.0
    %712 = vmatprep.subr.mxu0 0.0
    %713 = vmatpush1.msra.mxu0 0.0
    %714 = vmatprep.subr.mxu0 0.0
    %715 = vmatpush1.msra.mxu0 0.0
    %716 = vmatprep.subr.mxu0 0.0
    %717 = vmatpush1.msra.mxu0 0.0
    %718 = vmatprep.subr.mxu0 0.0
    %719 = vmatpush1.msra.mxu0 0.0
    %720 = vmatprep.subr.mxu0 0.0
    %721 = vmatpush1.msra.mxu0 0.0
    %722 = vmatprep.subr.mxu0 0.0
    %723 = vmatpush1.msra.mxu0 0.0
    %724 = vmatprep.subr.mxu0 0.0
    %725 = vmatpush1.msra.mxu0 0.0
    %726 = vmatprep.subr.mxu0 0.0
    %727 = vmatpush1.msra.mxu0 0.0
    %728 = vmatprep.subr.mxu0 0.0
    %729 = vmatpush1.msra.mxu0 0.0
    %730 = vmatprep.subr.mxu0 0.0
    %731 = vmatpush1.msra.mxu0 0.0
    %732 = vmatprep.subr.mxu0 0.0
    %733 = vmatpush1.msra.mxu0 0.0
    %734 = vmatprep.subr.mxu0 0.0
    %735 = vmatpush1.msra.mxu0 0.0
    %736 = vmatprep.subr.mxu0 0.0
    %737 = vmatpush1.msra.mxu0 0.0
    %738 = vmatprep.subr.mxu0 0.0
    %739 = vmatpush1.msra.mxu0 0.0
    %740 = vmatprep.subr.mxu0 0.0
    %741 = vmatpush1.msra.mxu0 0.0
    %742 = vmatprep.subr.mxu0 0.0
    %743 = vmatpush1.msra.mxu0 0.0
    %744 = vmatprep.subr.mxu0 0.0
    %745 = vmatpush1.msra.mxu0 0.0
    %746 = vmatprep.subr.mxu0 0.0
    %747 = vmatpush1.msra.mxu0 0.0
    %748 = vmatprep.subr.mxu0 0.0
    %749 = vmatpush1.msra.mxu0 0.0
    %750 = vmatprep.subr.mxu0 0.0
    %751 = vmatpush1.msra.mxu0 0.0
    %752 = vmatprep.subr.mxu0 0.0
    %753 = vmatpush1.msra.mxu0 0.0
    %754 = vmatprep.subr.mxu0 0.0
    %755 = vmatpush1.msra.mxu0 0.0
    %756 = vmatprep.mubr.f32.mxu0 0.0
    %757 = vmatmul.mubr.f32.gmra.mrb[0].mxu0 %v690
    %v758 = vpop.f32.mrb[0].mxu0
    %v759 = vadd.f32 %v527, %v758
    %v760 = vpop.f32.mrb[0].mxu0
    %761 = vdwg.mxu0
    %v762 = vmax.f32 %v759, 0.0
    %v763 = vld [vmem:[%s5] sm:$0xff]
    %v764 = vld [vmem:[%s5 + $0x8] sm:$0xff]
    %v765 = vld [vmem:[%s5 + $0x10] sm:$0xff]
    %v766 = vld [vmem:[%s5 + $0x18] sm:$0xff]
    %v767 = vld [vmem:[%s6] sm:$0x1]
    %v769 = vlaneseq
    %v770 = vshrl.u32 %v769, 7
    %v771 = vsub.s32 0, %v770
    %v772 = vrot.slane %v767, %v771
    %vm774 = vcmask 261120
    %v776 = vsel %vm774, %v762, 0
    %778 = vmatprep.subr.mxu0 0.0
    %779 = vmatpush1.msra.mxu0 %v763
    %780 = vmatprep.subr.mxu0 0.0
    %781 = vmatpush1.msra.mxu0 %v764
    %782 = vmatprep.subr.mxu0 0.0
    %783 = vmatpush1.msra.mxu0 %v765
    %784 = vmatprep.subr.mxu0 0.0
    %785 = vmatpush1.msra.mxu0 %v766
    %786 = vmatprep.subr.mxu0 0.0
    %787 = vmatpush1.msra.mxu0 0.0
    %788 = vmatprep.subr.mxu0 0.0
    %789 = vmatpush1.msra.mxu0 0.0
    %790 = vmatprep.subr.mxu0 0.0
    %791 = vmatpush1.msra.mxu0 0.0
    %792 = vmatprep.subr.mxu0 0.0
    %793 = vmatpush1.msra.mxu0 0.0
    %794 = vmatprep.subr.mxu0 0.0
    %795 = vmatpush1.msra.mxu0 0.0
    %796 = vmatprep.subr.mxu0 0.0
    %797 = vmatpush1.msra.mxu0 0.0
    %798 = vmatprep.subr.mxu0 0.0
    %799 = vmatpush1.msra.mxu0 0.0
    %800 = vmatprep.subr.mxu0 0.0
    %801 = vmatpush1.msra.mxu0 0.0
    %802 = vmatprep.subr.mxu0 0.0
    %803 = vmatpush1.msra.mxu0 0.0
    %804 = vmatprep.subr.mxu0 0.0
    %805 = vmatpush1.msra.mxu0 0.0
    %806 = vmatprep.subr.mxu0 0.0
    %807 = vmatpush1.msra.mxu0 0.0
    %808 = vmatprep.subr.mxu0 0.0
    %809 = vmatpush1.msra.mxu0 0.0
    %810 = vmatprep.subr.mxu0 0.0
    %811 = vmatpush1.msra.mxu0 0.0
    %812 = vmatprep.subr.mxu0 0.0
    %813 = vmatpush1.msra.mxu0 0.0
    %814 = vmatprep.subr.mxu0 0.0
    %815 = vmatpush1.msra.mxu0 0.0
    %816 = vmatprep.subr.mxu0 0.0
    %817 = vmatpush1.msra.mxu0 0.0
    %818 = vmatprep.subr.mxu0 0.0
    %819 = vmatpush1.msra.mxu0 0.0
    %820 = vmatprep.subr.mxu0 0.0
    %821 = vmatpush1.msra.mxu0 0.0
    %822 = vmatprep.subr.mxu0 0.0
    %823 = vmatpush1.msra.mxu0 0.0
    %824 = vmatprep.subr.mxu0 0.0
    %825 = vmatpush1.msra.mxu0 0.0
    %826 = vmatprep.subr.mxu0 0.0
    %827 = vmatpush1.msra.mxu0 0.0
    %828 = vmatprep.subr.mxu0 0.0
    %829 = vmatpush1.msra.mxu0 0.0
    %830 = vmatprep.subr.mxu0 0.0
    %831 = vmatpush1.msra.mxu0 0.0
    %832 = vmatprep.subr.mxu0 0.0
    %833 = vmatpush1.msra.mxu0 0.0
    %834 = vmatprep.subr.mxu0 0.0
    %835 = vmatpush1.msra.mxu0 0.0
    %836 = vmatprep.subr.mxu0 0.0
    %837 = vmatpush1.msra.mxu0 0.0
    %838 = vmatprep.subr.mxu0 0.0
    %839 = vmatpush1.msra.mxu0 0.0
    %840 = vmatprep.subr.mxu0 0.0
    %841 = vmatpush1.msra.mxu0 0.0
    %842 = vmatprep.mubr.f32.mxu0 0.0
    %843 = vmatmul.mubr.f32.gmra.mrb[0].mxu0 %v776
    %v844 = vpop.f32.mrb[0].mxu0
    %v845 = vadd.f32 %v772, %v844
    %v846 = vpop.f32.mrb[0].mxu0
    %847 = vdwg.mxu0
    %v848 = vxor.u32 %v845, 2147483648
    %v849 = vmul.f32 %v848, 1.442695
    %v850 = vpow.pop %v849
    %v851 = vadd.f32 %v850, 1.0
    %v852 = vrcp.pop %v851
    %v853 = vmul.f32 1.0, %v852
    %854 = vst [vmem:[#allocation2] sm:$0x3] %v853
    %v855 = vld [vmem:[%s7] sm:$0xff]
    %v856 = vld [vmem:[%s7 + $0x8] sm:$0xff]
    %v857 = vld [vmem:[%s7 + $0x10] sm:$0xff]
    %v858 = vld [vmem:[%s7 + $0x18] sm:$0xff]
    %v859 = vld [vmem:[%s7 + $0x20] sm:$0xff]
    %v860 = vld [vmem:[%s7 + $0x28] sm:$0xff]
    %v861 = vld [vmem:[%s7 + $0x30] sm:$0xff]
    %v862 = vld [vmem:[%s7 + $0x38] sm:$0xff]
    %v863 = vld [vmem:[%s7 + $0x40] sm:$0xff]
    %v864 = vld [vmem:[%s7 + $0x48] sm:$0xff]
    %v865 = vld [vmem:[%s7 + $0x50] sm:$0xff]
    %v866 = vld [vmem:[%s7 + $0x58] sm:$0xff]
    %v867 = vld [vmem:[%s7 + $0x60] sm:$0xff]
    %v868 = vld [vmem:[%s7 + $0x68] sm:$0xff]
    %v869 = vld [vmem:[%s7 + $0x70] sm:$0xff]
    %v870 = vld [vmem:[%s7 + $0x78] sm:$0xff]
    %871 = vmatprep.subr.mxu0 0.0
    %872 = vmatpush1.msra.mxu0 %v855
    %873 = vmatprep.subr.mxu0 0.0
    %874 = vmatpush1.msra.mxu0 %v856
    %875 = vmatprep.subr.mxu0 0.0
    %876 = vmatpush1.msra.mxu0 %v857
    %877 = vmatprep.subr.mxu0 0.0
    %878 = vmatpush1.msra.mxu0 %v858
    %879 = vmatprep.subr.mxu0 0.0
    %880 = vmatpush1.msra.mxu0 %v859
    %881 = vmatprep.subr.mxu0 0.0
    %882 = vmatpush1.msra.mxu0 %v860
    %883 = vmatprep.subr.mxu0 0.0
    %884 = vmatpush1.msra.mxu0 %v861
    %885 = vmatprep.subr.mxu0 0.0
    %886 = vmatpush1.msra.mxu0 %v862
    %887 = vmatprep.subr.mxu0 0.0
    %888 = vmatpush1.msra.mxu0 %v863
    %889 = vmatprep.subr.mxu0 0.0
    %890 = vmatpush1.msra.mxu0 %v864
    %891 = vmatprep.subr.mxu0 0.0
    %892 = vmatpush1.msra.mxu0 %v865
    %893 = vmatprep.subr.mxu0 0.0
    %894 = vmatpush1.msra.mxu0 %v866
    %895 = vmatprep.subr.mxu0 0.0
    %896 = vmatpush1.msra.mxu0 %v867
    %897 = vmatprep.subr.mxu0 0.0
    %898 = vmatpush1.msra.mxu0 %v868
    %899 = vmatprep.subr.mxu0 0.0
    %900 = vmatpush1.msra.mxu0 %v869
    %901 = vmatprep.subr.mxu0 0.0
    %902 = vmatpush1.msra.mxu0 %v870
    %903 = vmatprep.subr.mxu0 0.0
    %904 = vmatpush1.msra.mxu0 0.0
    %905 = vmatprep.subr.mxu0 0.0
    %906 = vmatpush1.msra.mxu0 0.0
    %907 = vmatprep.subr.mxu0 0.0
    %908 = vmatpush1.msra.mxu0 0.0
    %909 = vmatprep.subr.mxu0 0.0
    %910 = vmatpush1.msra.mxu0 0.0
    %911 = vmatprep.subr.mxu0 0.0
    %912 = vmatpush1.msra.mxu0 0.0
    %913 = vmatprep.subr.mxu0 0.0
    %914 = vmatpush1.msra.mxu0 0.0
    %915 = vmatprep.subr.mxu0 0.0
    %916 = vmatpush1.msra.mxu0 0.0
    %917 = vmatprep.subr.mxu0 0.0
    %918 = vmatpush1.msra.mxu0 0.0
    %919 = vmatprep.subr.mxu0 0.0
    %920 = vmatpush1.msra.mxu0 0.0
    %921 = vmatprep.subr.mxu0 0.0
    %922 = vmatpush1.msra.mxu0 0.0
    %923 = vmatprep.subr.mxu0 0.0
    %924 = vmatpush1.msra.mxu0 0.0
    %925 = vmatprep.subr.mxu0 0.0
    %926 = vmatpush1.msra.mxu0 0.0
    %927 = vmatprep.subr.mxu0 0.0
    %928 = vmatpush1.msra.mxu0 0.0
    %929 = vmatprep.subr.mxu0 0.0
    %930 = vmatpush1.msra.mxu0 0.0
    %931 = vmatprep.subr.mxu0 0.0
    %932 = vmatpush1.msra.mxu0 0.0
    %933 = vmatprep.subr.mxu0 0.0
    %934 = vmatpush1.msra.mxu0 0.0
    %935 = vmatprep.mubr.f32.mxu0 0.0
    %936 = vmatmul.mubr.f32.gmra.mrb[0].mxu0 %v853
    %v937 = vpop.f32.mrb[0].mxu0
    %v938 = vadd.f32 0.0, %v937
    %v939 = vpop.f32.mrb[0].mxu0
    %940 = vdwg.mxu0
    %v941 = vld [vmem:[%s8] sm:$0xff]
    %v942 = vld [vmem:[%s8 + $0x8] sm:$0xff]
    %v943 = vld [vmem:[%s8 + $0x10] sm:$0xff]
    %v944 = vld [vmem:[%s8 + $0x18] sm:$0xff]
    %v945 = vld [vmem:[%s9] sm:$0x1]
    %v947 = vlaneseq
    %v948 = vshrl.u32 %v947, 7
    %v949 = vsub.s32 0, %v948
    %v950 = vrot.slane %v945, %v949
    %v953 = vsel %vm774, %v938, 0
    %955 = vmatprep.subr.mxu0 0.0
    %956 = vmatpush1.msra.mxu0 %v941
    %957 = vmatprep.subr.mxu0 0.0
    %958 = vmatpush1.msra.mxu0 %v942
    %959 = vmatprep.subr.mxu0 0.0
    %960 = vmatpush1.msra.mxu0 %v943
    %961 = vmatprep.subr.mxu0 0.0
    %962 = vmatpush1.msra.mxu0 %v944
    %963 = vmatprep.subr.mxu0 0.0
    %964 = vmatpush1.msra.mxu0 0.0
    %965 = vmatprep.subr.mxu0 0.0
    %966 = vmatpush1.msra.mxu0 0.0
    %967 = vmatprep.subr.mxu0 0.0
    %968 = vmatpush1.msra.mxu0 0.0
    %969 = vmatprep.subr.mxu0 0.0
    %970 = vmatpush1.msra.mxu0 0.0
    %971 = vmatprep.subr.mxu0 0.0
    %972 = vmatpush1.msra.mxu0 0.0
    %973 = vmatprep.subr.mxu0 0.0
    %974 = vmatpush1.msra.mxu0 0.0
    %975 = vmatprep.subr.mxu0 0.0
    %976 = vmatpush1.msra.mxu0 0.0
    %977 = vmatprep.subr.mxu0 0.0
    %978 = vmatpush1.msra.mxu0 0.0
    %979 = vmatprep.subr.mxu0 0.0
    %980 = vmatpush1.msra.mxu0 0.0
    %981 = vmatprep.subr.mxu0 0.0
    %982 = vmatpush1.msra.mxu0 0.0
    %983 = vmatprep.subr.mxu0 0.0
    %984 = vmatpush1.msra.mxu0 0.0
    %985 = vmatprep.subr.mxu0 0.0
    %986 = vmatpush1.msra.mxu0 0.0
    %987 = vmatprep.subr.mxu0 0.0
    %988 = vmatpush1.msra.mxu0 0.0
    %989 = vmatprep.subr.mxu0 0.0
    %990 = vmatpush1.msra.mxu0 0.0
    %991 = vmatprep.subr.mxu0 0.0
    %992 = vmatpush1.msra.mxu0 0.0
    %993 = vmatprep.subr.mxu0 0.0
    %994 = vmatpush1.msra.mxu0 0.0
    %995 = vmatprep.subr.mxu0 0.0
    %996 = vmatpush1.msra.mxu0 0.0
    %997 = vmatprep.subr.mxu0 0.0
    %998 = vmatpush1.msra.mxu0 0.0
    %999 = vmatprep.subr.mxu0 0.0
    %1000 = vmatpush1.msra.mxu0 0.0
    %1001 = vmatprep.subr.mxu0 0.0
    %1002 = vmatpush1.msra.mxu0 0.0
    %1003 = vmatprep.subr.mxu0 0.0
    %1004 = vmatpush1.msra.mxu0 0.0
    %1005 = vmatprep.subr.mxu0 0.0
    %1006 = vmatpush1.msra.mxu0 0.0
    %1007 = vmatprep.subr.mxu0 0.0
    %1008 = vmatpush1.msra.mxu0 0.0
    %1009 = vmatprep.subr.mxu0 0.0
    %1010 = vmatpush1.msra.mxu0 0.0
    %1011 = vmatprep.subr.mxu0 0.0
    %1012 = vmatpush1.msra.mxu0 0.0
    %1013 = vmatprep.subr.mxu0 0.0
    %1014 = vmatpush1.msra.mxu0 0.0
    %1015 = vmatprep.subr.mxu0 0.0
    %1016 = vmatpush1.msra.mxu0 0.0
    %1017 = vmatprep.subr.mxu0 0.0
    %1018 = vmatpush1.msra.mxu0 0.0
    %1019 = vmatprep.mubr.f32.mxu0 0.0
    %1020 = vmatmul.mubr.f32.gmra.mrb[0].mxu0 %v953
    %v1021 = vpop.f32.mrb[0].mxu0
    %v1022 = vadd.f32 %v950, %v1021
    %v1023 = vpop.f32.mrb[0].mxu0
    %1024 = vdwg.mxu0
    %v1025 = vld [vmem:[%s10] sm:$0xff]
    %v1026 = vld [vmem:[%s10 + $0x8] sm:$0xff]
    %v1027 = vld [vmem:[%s10 + $0x10] sm:$0xff]
    %v1028 = vld [vmem:[%s10 + $0x18] sm:$0xff]
    %v1029 = vld [vmem:[%s11] sm:$0x1]
    %v1031 = vlaneseq
    %v1032 = vshrl.u32 %v1031, 7
    %v1033 = vsub.s32 0, %v1032
    %v1034 = vrot.slane %v1029, %v1033
    %v1037 = vsel %vm774, %v1022, 0
    %1039 = vmatprep.subr.mxu0 0.0
    %1040 = vmatpush1.msra.mxu0 %v1025
    %1041 = vmatprep.subr.mxu0 0.0
    %1042 = vmatpush1.msra.mxu0 %v1026
    %1043 = vmatprep.subr.mxu0 0.0
    %1044 = vmatpush1.msra.mxu0 %v1027
    %1045 = vmatprep.subr.mxu0 0.0
    %1046 = vmatpush1.msra.mxu0 %v1028
    %1047 = vmatprep.subr.mxu0 0.0
    %1048 = vmatpush1.msra.mxu0 0.0
    %1049 = vmatprep.subr.mxu0 0.0
    %1050 = vmatpush1.msra.mxu0 0.0
    %1051 = vmatprep.subr.mxu0 0.0
    %1052 = vmatpush1.msra.mxu0 0.0
    %1053 = vmatprep.subr.mxu0 0.0
    %1054 = vmatpush1.msra.mxu0 0.0
    %1055 = vmatprep.subr.mxu0 0.0
    %1056 = vmatpush1.msra.mxu0 0.0
    %1057 = vmatprep.subr.mxu0 0.0
    %1058 = vmatpush1.msra.mxu0 0.0
    %1059 = vmatprep.subr.mxu0 0.0
    %1060 = vmatpush1.msra.mxu0 0.0
    %1061 = vmatprep.subr.mxu0 0.0
    %1062 = vmatpush1.msra.mxu0 0.0
    %1063 = vmatprep.subr.mxu0 0.0
    %1064 = vmatpush1.msra.mxu0 0.0
    %1065 = vmatprep.subr.mxu0 0.0
    %1066 = vmatpush1.msra.mxu0 0.0
    %1067 = vmatprep.subr.mxu0 0.0
    %1068 = vmatpush1.msra.mxu0 0.0
    %1069 = vmatprep.subr.mxu0 0.0
    %1070 = vmatpush1.msra.mxu0 0.0
    %1071 = vmatprep.subr.mxu0 0.0
    %1072 = vmatpush1.msra.mxu0 0.0
    %1073 = vmatprep.subr.mxu0 0.0
    %1074 = vmatpush1.msra.mxu0 0.0
    %1075 = vmatprep.subr.mxu0 0.0
    %1076 = vmatpush1.msra.mxu0 0.0
    %1077 = vmatprep.subr.mxu0 0.0
    %1078 = vmatpush1.msra.mxu0 0.0
    %1079 = vmatprep.subr.mxu0 0.0
    %1080 = vmatpush1.msra.mxu0 0.0
    %1081 = vmatprep.subr.mxu0 0.0
    %1082 = vmatpush1.msra.mxu0 0.0
    %1083 = vmatprep.subr.mxu0 0.0
    %1084 = vmatpush1.msra.mxu0 0.0
    %1085 = vmatprep.subr.mxu0 0.0
    %1086 = vmatpush1.msra.mxu0 0.0
    %1087 = vmatprep.subr.mxu0 0.0
    %1088 = vmatpush1.msra.mxu0 0.0
    %1089 = vmatprep.subr.mxu0 0.0
    %1090 = vmatpush1.msra.mxu0 0.0
    %1091 = vmatprep.subr.mxu0 0.0
    %1092 = vmatpush1.msra.mxu0 0.0
    %1093 = vmatprep.subr.mxu0 0.0
    %1094 = vmatpush1.msra.mxu0 0.0
    %1095 = vmatprep.subr.mxu0 0.0
    %1096 = vmatpush1.msra.mxu0 0.0
    %1097 = vmatprep.subr.mxu0 0.0
    %1098 = vmatpush1.msra.mxu0 0.0
    %1099 = vmatprep.subr.mxu0 0.0
    %1100 = vmatpush1.msra.mxu0 0.0
    %1101 = vmatprep.subr.mxu0 0.0
    %1102 = vmatpush1.msra.mxu0 0.0
    %1103 = vmatprep.mubr.f32.mxu0 0.0
    %1104 = vmatmul.mubr.f32.gmra.mrb[0].mxu0 %v1037
    %v1105 = vpop.f32.mrb[0].mxu0
    %v1106 = vadd.f32 %v1034, %v1105
    %v1107 = vpop.f32.mrb[0].mxu0
    %1108 = vdwg.mxu0
    %v1109 = vadd.f32 %v938, %v1106
    %v1110 = vld [vmem:[%s12] sm:$0x1]
    %v1111 = vld [vmem:[%s13] sm:$0x1]
    %vm1112 = vcmask 254976
    %v1113 = vsel %vm1112, %v1109, 0.0
    %1114 = vadd.xlane.f32.xlu0 %v1113
    %v1115 = vpop.xlane.xlu0 %1114
    %v1116 = vmul.f32 %v1115, 0.03125
    %v1117 = vmul.f32 %v1109, %v1109
    %v1118 = vsel %vm1112, %v1117, 0.0
    %1119 = vadd.xlane.f32.xlu0 %v1118
    %v1120 = vpop.xlane.xlu0 %1119
    %v1121 = vmul.f32 %v1120, 0.03125
    %v1122 = vmul.f32 %v1116, %v1116
    %v1123 = vsub.f32 %v1121, %v1122
    %v1124 = vsub.f32 %v1109, %v1116
    %v1125 = vadd.f32 %v1123, 1e-05
    %v1126 = vrsqrt.pop %v1125
    %v1127 = vmul.f32 %v1124, %v1126
    %v1129 = vlaneseq
    %v1130 = vshrl.u32 %v1129, 7
    %v1131 = vsub.s32 0, %v1130
    %v1132 = vrot.slane %v1110, %v1131
    %v1134 = vmul.f32 %v1127, %v1132
    %v1136 = vlaneseq
    %v1137 = vshrl.u32 %v1136, 7
    %v1138 = vsub.s32 0, %v1137
    %v1139 = vrot.slane %v1111, %v1138
    %v1141 = vadd.f32 %v1134, %v1139
    %v1142 = vld [vmem:[%s14] sm:$0xff]
    %v1143 = vld [vmem:[%s14 + $0x8] sm:$0xff]
    %v1144 = vld [vmem:[%s14 + $0x10] sm:$0xff]
    %v1145 = vld [vmem:[%s14 + $0x18] sm:$0xff]
    %v1146 = vld [vmem:[%s15] sm:$0x1]
    %v1148 = vlaneseq
    %v1149 = vshrl.u32 %v1148, 7
    %v1150 = vsub.s32 0, %v1149
    %v1151 = vrot.slane %v1146, %v1150
    %v1154 = vsel %vm774, %v1141, 0
    %1156 = vmatprep.subr.mxu0 0.0
    %1157 = vmatpush1.msra.mxu0 %v1142
    %1158 = vmatprep.subr.mxu0 0.0
    %1159 = vmatpush1.msra.mxu0 %v1143
    %1160 = vmatprep.subr.mxu0 0.0
    %1161 = vmatpush1.msra.mxu0 %v1144
    %1162 = vmatprep.subr.mxu0 0.0
    %1163 = vmatpush1.msra.mxu0 %v1145
    %1164 = vmatprep.subr.mxu0 0.0
    %1165 = vmatpush1.msra.mxu0 0.0
    %1166 = vmatprep.subr.mxu0 0.0
    %1167 = vmatpush1.msra.mxu0 0.0
    %1168 = vmatprep.subr.mxu0 0.0
    %1169 = vmatpush1.msra.mxu0 0.0
    %1170 = vmatprep.subr.mxu0 0.0
    %1171 = vmatpush1.msra.mxu0 0.0
    %1172 = vmatprep.subr.mxu0 0.0
    %1173 = vmatpush1.msra.mxu0 0.0
    %1174 = vmatprep.subr.mxu0 0.0
    %1175 = vmatpush1.msra.mxu0 0.0
    %1176 = vmatprep.subr.mxu0 0.0
    %1177 = vmatpush1.msra.mxu0 0.0
    %1178 = vmatprep.subr.mxu0 0.0
    %1179 = vmatpush1.msra.mxu0 0.0
    %1180 = vmatprep.subr.mxu0 0.0
    %1181 = vmatpush1.msra.mxu0 0.0
    %1182 = vmatprep.subr.mxu0 0.0
    %1183 = vmatpush1.msra.mxu0 0.0
    %1184 = vmatprep.subr.mxu0 0.0
    %1185 = vmatpush1.msra.mxu0 0.0
    %1186 = vmatprep.subr.mxu0 0.0
    %1187 = vmatpush1.msra.mxu0 0.0
    %1188 = vmatprep.subr.mxu0 0.0
    %1189 = vmatpush1.msra.mxu0 0.0
    %1190 = vmatprep.subr.mxu0 0.0
    %1191 = vmatpush1.msra.mxu0 0.0
    %1192 = vmatprep.subr.mxu0 0.0
    %1193 = vmatpush1.msra.mxu0 0.0
    %1194 = vmatprep.subr.mxu0 0.0
    %1195 = vmatpush1.msra.mxu0 0.0
    %1196 = vmatprep.subr.mxu0 0.0
    %1197 = vmatpush1.msra.mxu0 0.0
    %1198 = vmatprep.subr.mxu0 0.0
    %1199 = vmatpush1.msra.mxu0 0.0
    %1200 = vmatprep.subr.mxu0 0.0
    %1201 = vmatpush1.msra.mxu0 0.0
    %1202 = vmatprep.subr.mxu0 0.0
    %1203 = vmatpush1.msra.mxu0 0.0
    %1204 = vmatprep.subr.mxu0 0.0
    %1205 = vmatpush1.msra.mxu0 0.0
    %1206 = vmatprep.subr.mxu0 0.0
    %1207 = vmatpush1.msra.mxu0 0.0
    %1208 = vmatprep.subr.mxu0 0.0
    %1209 = vmatpush1.msra.mxu0 0.0
    %1210 = vmatprep.subr.mxu0 0.0
    %1211 = vmatpush1.msra.mxu0 0.0
    %1212 = vmatprep.subr.mxu0 0.0
    %1213 = vmatpush1.msra.mxu0 0.0
    %1214 = vmatprep.subr.mxu0 0.0
    %1215 = vmatpush1.msra.mxu0 0.0
    %1216 = vmatprep.subr.mxu0 0.0
    %1217 = vmatpush1.msra.mxu0 0.0
    %1218 = vmatprep.subr.mxu0 0.0
    %1219 = vmatpush1.msra.mxu0 0.0
    %1220 = vmatprep.mubr.f32.mxu0 0.0
    %1221 = vmatmul.mubr.f32.gmra.mrb[0].mxu0 %v1154
    %v1222 = vpop.f32.mrb[0].mxu0
    %v1223 = vadd.f32 %v1151, %v1222
    %v1224 = vpop.f32.mrb[0].mxu0
    %1225 = vdwg.mxu0
    %v1226 = vmul.f32 %v1223, %v1223
    %v1227 = vmul.f32 %v1223, %v1226
    %v1228 = vmul.f32 %v1227, 0.044715
    %v1229 = vadd.f32 %v1223, %v1228
    %v1230 = vmul.f32 %v1229, 0.7978846
    %v1231 = vtanh.pop %v1230
    %v1232 = vadd.f32 %v1231, 1.0
    %v1233 = vmul.f32 %v1232, 0.5
    %v1234 = vmul.f32 %v1223, %v1233
    %v1235 = vld [vmem:[%s16] sm:$0xff]
    %v1236 = vld [vmem:[%s16 + $0x8] sm:$0xff]
    %v1237 = vld [vmem:[%s16 + $0x10] sm:$0xff]
    %v1238 = vld [vmem:[%s16 + $0x18] sm:$0xff]
    %v1239 = vld [vmem:[%s16 + $0x20] sm:$0xff]
    %v1240 = vld [vmem:[%s16 + $0x28] sm:$0xff]
    %v1241 = vld [vmem:[%s16 + $0x30] sm:$0xff]
    %v1242 = vld [vmem:[%s16 + $0x38] sm:$0xff]
    %v1243 = vld [vmem:[%s16 + $0x40] sm:$0xff]
    %v1244 = vld [vmem:[%s16 + $0x48] sm:$0xff]
    %v1245 = vld [vmem:[%s16 + $0x50] sm:$0xff]
    %v1246 = vld [vmem:[%s16 + $0x58] sm:$0xff]
    %v1247 = vld [vmem:[%s16 + $0x60] sm:$0xff]
    %v1248 = vld [vmem:[%s16 + $0x68] sm:$0xff]
    %v1249 = vld [vmem:[%s16 + $0x70] sm:$0xff]
    %v1250 = vld [vmem:[%s16 + $0x78] sm:$0xff]
    %v1251 = vld [vmem:[%s17] sm:$0x1]
    %v1253 = vlaneseq
    %v1254 = vshrl.u32 %v1253, 7
    %v1255 = vsub.s32 0, %v1254
    %v1256 = vrot.slane %v1251, %v1255
    %1258 = vmatprep.subr.mxu0 0.0
    %1259 = vmatpush1.msra.mxu0 %v1235
    %1260 = vmatprep.subr.mxu0 0.0
    %1261 = vmatpush1.msra.mxu0 %v1236
    %1262 = vmatprep.subr.mxu0 0.0
    %1263 = vmatpush1.msra.mxu0 %v1237
    %1264 = vmatprep.subr.mxu0 0.0
    %1265 = vmatpush1.msra.mxu0 %v1238
    %1266 = vmatprep.subr.mxu0 0.0
    %1267 = vmatpush1.msra.mxu0 %v1239
    %1268 = vmatprep.subr.mxu0 0.0
    %1269 = vmatpush1.msra.mxu0 %v1240
    %1270 = vmatprep.subr.mxu0 0.0
    %1271 = vmatpush1.msra.mxu0 %v1241
    %1272 = vmatprep.subr.mxu0 0.0
    %1273 = vmatpush1.msra.mxu0 %v1242
    %1274 = vmatprep.subr.mxu0 0.0
    %1275 = vmatpush1.msra.mxu0 %v1243
    %1276 = vmatprep.subr.mxu0 0.0
    %1277 = vmatpush1.msra.mxu0 %v1244
    %1278 = vmatprep.subr.mxu0 0.0
    %1279 = vmatpush1.msra.mxu0 %v1245
    %1280 = vmatprep.subr.mxu0 0.0
    %1281 = vmatpush1.msra.mxu0 %v1246
    %1282 = vmatprep.subr.mxu0 0.0
    %1283 = vmatpush1.msra.mxu0 %v1247
    %1284 = vmatprep.subr.mxu0 0.0
    %1285 = vmatpush1.msra.mxu0 %v1248
    %1286 = vmatprep.subr.mxu0 0.0
    %1287 = vmatpush1.msra.mxu0 %v1249
    %1288 = vmatprep.subr.mxu0 0.0
    %1289 = vmatpush1.msra.mxu0 %v1250
    %1290 = vmatprep.subr.mxu0 0.0
    %1291 = vmatpush1.msra.mxu0 0.0
    %1292 = vmatprep.subr.mxu0 0.0
    %1293 = vmatpush1.msra.mxu0 0.0
    %1294 = vmatprep.subr.mxu0 0.0
    %1295 = vmatpush1.msra.mxu0 0.0
    %1296 = vmatprep.subr.mxu0 0.0
    %1297 = vmatpush1.msra.mxu0 0.0
    %1298 = vmatprep.subr.mxu0 0.0
    %1299 = vmatpush1.msra.mxu0 0.0
    %1300 = vmatprep.subr.mxu0 0.0
    %1301 = vmatpush1.msra.mxu0 0.0
    %1302 = vmatprep.subr.mxu0 0.0
    %1303 = vmatpush1.msra.mxu0 0.0
    %1304 = vmatprep.subr.mxu0 0.0
    %1305 = vmatpush1.msra.mxu0 0.0
    %1306 = vmatprep.subr.mxu0 0.0
    %1307 = vmatpush1.msra.mxu0 0.0
    %1308 = vmatprep.subr.mxu0 0.0
    %1309 = vmatpush1.msra.mxu0 0.0
    %1310 = vmatprep.subr.mxu0 0.0
    %1311 = vmatpush1.msra.mxu0 0.0
    %1312 = vmatprep.subr.mxu0 0.0
    %1313 = vmatpush1.msra.mxu0 0.0
    %1314 = vmatprep.subr.mxu0 0.0
    %1315 = vmatpush1.msra.mxu0 0.0
    %1316 = vmatprep.subr.mxu0 0.0
    %1317 = vmatpush1.msra.mxu0 0.0
    %1318 = vmatprep.subr.mxu0 0.0
    %1319 = vmatpush1.msra.mxu0 0.0
    %1320 = vmatprep.subr.mxu0 0.0
    %1321 = vmatpush1.msra.mxu0 0.0
    %1322 = vmatprep.mubr.f32.mxu0 0.0
    %1323 = vmatmul.mubr.f32.gmra.mrb[0].mxu0 %v1234
    %v1324 = vpop.f32.mrb[0].mxu0
    %v1325 = vadd.f32 %v1256, %v1324
    %v1326 = vpop.f32.mrb[0].mxu0
    %1327 = vdwg.mxu0
    %v1328 = vadd.f32 %v1141, %v1325
    %v1329 = vld [vmem:[%s18] sm:$0x1]
    %v1330 = vld [vmem:[%s19] sm:$0x1]
    %v1331 = vsel %vm1112, %v1328, 0.0
    %1332 = vadd.xlane.f32.xlu0 %v1331
    %v1333 = vpop.xlane.xlu0 %1332
    %v1334 = vmul.f32 %v1333, 0.03125
    %v1335 = vmul.f32 %v1328, %v1328
    %v1336 = vsel %vm1112, %v1335, 0.0
    %1337 = vadd.xlane.f32.xlu0 %v1336
    %v1338 = vpop.xlane.xlu0 %1337
    %v1339 = vmul.f32 %v1338, 0.03125
    %v1340 = vmul.f32 %v1334, %v1334
    %v1341 = vsub.f32 %v1339, %v1340
    %v1342 = vsub.f32 %v1328, %v1334
    %v1343 = vadd.f32 %v1341, 1e-05
    %v1344 = vrsqrt.pop %v1343
    %v1345 = vmul.f32 %v1342, %v1344
    %v1347 = vlaneseq
    %v1348 = vshrl.u32 %v1347, 7
    %v1349 = vsub.s32 0, %v1348
    %v1350 = vrot.slane %v1329, %v1349
    %v1352 = vmul.f32 %v1345, %v1350
    %v1354 = vlaneseq
    %v1355 = vshrl.u32 %v1354, 7
    %v1356 = vsub.s32 0, %v1355
    %v1357 = vrot.slane %v1330, %v1356
    %v1359 = vadd.f32 %v1352, %v1357
    %s1360 = scalar_lea.vmem %s8, 32
    %v1361 = vld [vmem:[%s1360] sm:$0xff]
    %v1362 = vld [vmem:[%s1360 + $0x8] sm:$0xff]
    %v1363 = vld [vmem:[%s1360 + $0x10] sm:$0xff]
    %v1364 = vld [vmem:[%s1360 + $0x18] sm:$0xff]
    %s1365 = scalar_lea.vmem %s9, 1
    %v1366 = vld [vmem:[%s1365] sm:$0x1]
    %v1368 = vlaneseq
    %v1369 = vshrl.u32 %v1368, 7
    %v1370 = vsub.s32 0, %v1369
    %v1371 = vrot.slane %v1366, %v1370
    %v1374 = vsel %vm774, %v1359, 0
    %1376 = vmatprep.subr.mxu0 0.0
    %1377 = vmatpush1.msra.mxu0 %v1361
    %1378 = vmatprep.subr.mxu0 0.0
    %1379 = vmatpush1.msra.mxu0 %v1362
    %1380 = vmatprep.subr.mxu0 0.0
    %1381 = vmatpush1.msra.mxu0 %v1363
    %1382 = vmatprep.subr.mxu0 0.0
    %1383 = vmatpush1.msra.mxu0 %v1364
    %1384 = vmatprep.subr.mxu0 0.0
    %1385 = vmatpush1.msra.mxu0 0.0
    %1386 = vmatprep.subr.mxu0 0.0
    %1387 = vmatpush1.msra.mxu0 0.0
    %1388 = vmatprep.subr.mxu0 0.0
    %1389 = vmatpush1.msra.mxu0 0.0
    %1390 = vmatprep.subr.mxu0 0.0
    %1391 = vmatpush1.msra.mxu0 0.0
    %1392 = vmatprep.subr.mxu0 0.0
    %1393 = vmatpush1.msra.mxu0 0.0
    %1394 = vmatprep.subr.mxu0 0.0
    %1395 = vmatpush1.msra.mxu0 0.0
    %1396 = vmatprep.subr.mxu0 0.0
    %1397 = vmatpush1.msra.mxu0 0.0
    %1398 = vmatprep.subr.mxu0 0.0
    %1399 = vmatpush1.msra.mxu0 0.0
    %1400 = vmatprep.subr.mxu0 0.0
    %1401 = vmatpush1.msra.mxu0 0.0
    %1402 = vmatprep.subr.mxu0 0.0
    %1403 = vmatpush1.msra.mxu0 0.0
    %1404 = vmatprep.subr.mxu0 0.0
    %1405 = vmatpush1.msra.mxu0 0.0
    %1406 = vmatprep.subr.mxu0 0.0
    %1407 = vmatpush1.msra.mxu0 0.0
    %1408 = vmatprep.subr.mxu0 0.0
    %1409 = vmatpush1.msra.mxu0 0.0
    %1410 = vmatprep.subr.mxu0 0.0
    %1411 = vmatpush1.msra.mxu0 0.0
    %1412 = vmatprep.subr.mxu0 0.0
    %1413 = vmatpush1.msra.mxu0 0.0
    %1414 = vmatprep.subr.mxu0 0.0
    %1415 = vmatpush1.msra.mxu0 0.0
    %1416 = vmatprep.subr.mxu0 0.0
    %1417 = vmatpush1.msra.mxu0 0.0
    %1418 = vmatprep.subr.mxu0 0.0
    %1419 = vmatpush1.msra.mxu0 0.0
    %1420 = vmatprep.subr.mxu0 0.0
    %1421 = vmatpush1.msra.mxu0 0.0
    %1422 = vmatprep.subr.mxu0 0.0
    %1423 = vmatpush1.msra.mxu0 0.0
    %1424 = vmatprep.subr.mxu0 0.0
    %1425 = vmatpush1.msra.mxu0 0.0
    %1426 = vmatprep.subr.mxu0 0.0
    %1427 = vmatpush1.msra.mxu0 0.0
    %1428 = vmatprep.subr.mxu0 0.0
    %1429 = vmatpush1.msra.mxu0 0.0
    %1430 = vmatprep.subr.mxu0 0.0
    %1431 = vmatpush1.msra.mxu0 0.0
    %1432 = vmatprep.subr.mxu0 0.0
    %1433 = vmatpush1.msra.mxu0 0.0
    %1434 = vmatprep.subr.mxu0 0.0
    %1435 = vmatpush1.msra.mxu0 0.0
    %1436 = vmatprep.subr.mxu0 0.0
    %1437 = vmatpush1.msra.mxu0 0.0
    %1438 = vmatprep.subr.mxu0 0.0
    %1439 = vmatpush1.msra.mxu0 0.0
    %1440 = vmatprep.mubr.f32.mxu0 0.0
    %1441 = vmatmul.mubr.f32.gmra.mrb[0].mxu0 %v1374
    %v1442 = vpop.f32.mrb[0].mxu0
    %v1443 = vadd.f32 %v1371, %v1442
    %v1444 = vpop.f32.mrb[0].mxu0
    %1445 = vdwg.mxu0
    %s1446 = scalar_lea.vmem %s10, 32
    %v1447 = vld [vmem:[%s1446] sm:$0xff]
    %v1448 = vld [vmem:[%s1446 + $0x8] sm:$0xff]
    %v1449 = vld [vmem:[%s1446 + $0x10] sm:$0xff]
    %v1450 = vld [vmem:[%s1446 + $0x18] sm:$0xff]
    %s1451 = scalar_lea.vmem %s11, 1
    %v1452 = vld [vmem:[%s1451] sm:$0x1]
    %v1454 = vlaneseq
    %v1455 = vshrl.u32 %v1454, 7
    %v1456 = vsub.s32 0, %v1455
    %v1457 = vrot.slane %v1452, %v1456
    %v1460 = vsel %vm774, %v1443, 0
    %1462 = vmatprep.subr.mxu0 0.0
    %1463 = vmatpush1.msra.mxu0 %v1447
    %1464 = vmatprep.subr.mxu0 0.0
    %1465 = vmatpush1.msra.mxu0 %v1448
    %1466 = vmatprep.subr.mxu0 0.0
    %1467 = vmatpush1.msra.mxu0 %v1449
    %1468 = vmatprep.subr.mxu0 0.0
    %1469 = vmatpush1.msra.mxu0 %v1450
    %1470 = vmatprep.subr.mxu0 0.0
    %1471 = vmatpush1.msra.mxu0 0.0
    %1472 = vmatprep.subr.mxu0 0.0
    %1473 = vmatpush1.msra.mxu0 0.0
    %1474 = vmatprep.subr.mxu0 0.0
    %1475 = vmatpush1.msra.mxu0 0.0
    %1476 = vmatprep.subr.mxu0 0.0
    %1477 = vmatpush1.msra.mxu0 0.0
    %1478 = vmatprep.subr.mxu0 0.0
    %1479 = vmatpush1.msra.mxu0 0.0
    %1480 = vmatprep.subr.mxu0 0.0
    %1481 = vmatpush1.msra.mxu0 0.0
    %1482 = vmatprep.subr.mxu0 0.0
    %1483 = vmatpush1.msra.mxu0 0.0
    %1484 = vmatprep.subr.mxu0 0.0
    %1485 = vmatpush1.msra.mxu0 0.0
    %1486 = vmatprep.subr.mxu0 0.0
    %1487 = vmatpush1.msra.mxu0 0.0
    %1488 = vmatprep.subr.mxu0 0.0
    %1489 = vmatpush1.msra.mxu0 0.0
    %1490 = vmatprep.subr.mxu0 0.0
    %1491 = vmatpush1.msra.mxu0 0.0
    %1492 = vmatprep.subr.mxu0 0.0
    %1493 = vmatpush1.msra.mxu0 0.0
    %1494 = vmatprep.subr.mxu0 0.0
    %1495 = vmatpush1.msra.mxu0 0.0
    %1496 = vmatprep.subr.mxu0 0.0
    %1497 = vmatpush1.msra.mxu0 0.0
    %1498 = vmatprep.subr.mxu0 0.0
    %1499 = vmatpush1.msra.mxu0 0.0
    %1500 = vmatprep.subr.mxu0 0.0
    %1501 = vmatpush1.msra.mxu0 0.0
    %1502 = vmatprep.subr.mxu0 0.0
    %1503 = vmatpush1.msra.mxu0 0.0
    %1504 = vmatprep.subr.mxu0 0.0
    %1505 = vmatpush1.msra.mxu0 0.0
    %1506 = vmatprep.subr.mxu0 0.0
    %1507 = vmatpush1.msra.mxu0 0.0
    %1508 = vmatprep.subr.mxu0 0.0
    %1509 = vmatpush1.msra.mxu0 0.0
    %1510 = vmatprep.subr.mxu0 0.0
    %1511 = vmatpush1.msra.mxu0 0.0
    %1512 = vmatprep.subr.mxu0 0.0
    %1513 = vmatpush1.msra.mxu0 0.0
    %1514 = vmatprep.subr.mxu0 0.0
    %1515 = vmatpush1.msra.mxu0 0.0
    %1516 = vmatprep.subr.mxu0 0.0
    %1517 = vmatpush1.msra.mxu0 0.0
    %1518 = vmatprep.subr.mxu0 0.0
    %1519 = vmatpush1.msra.mxu0 0.0
    %1520 = vmatprep.subr.mxu0 0.0
    %1521 = vmatpush1.msra.mxu0 0.0
    %1522 = vmatprep.subr.mxu0 0.0
    %1523 = vmatpush1.msra.mxu0 0.0
    %1524 = vmatprep.subr.mxu0 0.0
    %1525 = vmatpush1.msra.mxu0 0.0
    %1526 = vmatprep.mubr.f32.mxu0 0.0
    %1527 = vmatmul.mubr.f32.gmra.mrb[0].mxu0 %v1460
    %v1528 = vpop.f32.mrb[0].mxu0
    %v1529 = vadd.f32 %v1457, %v1528
    %v1530 = vpop.f32.mrb[0].mxu0
    %1531 = vdwg.mxu0
    %v1532 = vadd.f32 %v1359, %v1529
    %s1533 = scalar_lea.vmem %s12, 1
    %v1534 = vld [vmem:[%s1533] sm:$0x1]
    %s1535 = scalar_lea.vmem %s13, 1
    %v1536 = vld [vmem:[%s1535] sm:$0x1]
    %v1537 = vsel %vm1112, %v1532, 0.0
    %1538 = vadd.xlane.f32.xlu0 %v1537
    %v1539 = vpop.xlane.xlu0 %1538
    %v1540 = vmul.f32 %v1539, 0.03125
    %v1541 = vmul.f32 %v1532, %v1532
    %v1542 = vsel %vm1112, %v1541, 0.0
    %1543 = vadd.xlane.f32.xlu0 %v1542
    %v1544 = vpop.xlane.xlu0 %1543
    %v1545 = vmul.f32 %v1544, 0.03125
    %v1546 = vmul.f32 %v1540, %v1540
    %v1547 = vsub.f32 %v1545, %v1546
    %v1548 = vsub.f32 %v1532, %v1540
    %v1549 = vadd.f32 %v1547, 1e-05
    %v1550 = vrsqrt.pop %v1549
    %v1551 = vmul.f32 %v1548, %v1550
    %v1553 = vlaneseq
    %v1554 = vshrl.u32 %v1553, 7
    %v1555 = vsub.s32 0, %v1554
    %v1556 = vrot.slane %v1534, %v1555
    %v1558 = vmul.f32 %v1551, %v1556
    %v1560 = vlaneseq
    %v1561 = vshrl.u32 %v1560, 7
    %v1562 = vsub.s32 0, %v1561
    %v1563 = vrot.slane %v1536, %v1562
    %v1565 = vadd.f32 %v1558, %v1563
    %s1566 = scalar_lea.vmem %s14, 32
    %v1567 = vld [vmem:[%s1566] sm:$0xff]
    %v1568 = vld [vmem:[%s1566 + $0x8] sm:$0xff]
    %v1569 = vld [vmem:[%s1566 + $0x10] sm:$0xff]
    %v1570 = vld [vmem:[%s1566 + $0x18] sm:$0xff]
    %s1571 = scalar_lea.vmem %s15, 1
    %v1572 = vld [vmem:[%s1571] sm:$0x1]
    %v1574 = vlaneseq
    %v1575 = vshrl.u32 %v1574, 7
    %v1576 = vsub.s32 0, %v1575
    %v1577 = vrot.slane %v1572, %v1576
    %v1580 = vsel %vm774, %v1565, 0
    %1582 = vmatprep.subr.mxu0 0.0
    %1583 = vmatpush1.msra.mxu0 %v1567
    %1584 = vmatprep.subr.mxu0 0.0
    %1585 = vmatpush1.msra.mxu0 %v1568
    %1586 = vmatprep.subr.mxu0 0.0
    %1587 = vmatpush1.msra.mxu0 %v1569
    %1588 = vmatprep.subr.mxu0 0.0
    %1589 = vmatpush1.msra.mxu0 %v1570
    %1590 = vmatprep.subr.mxu0 0.0
    %1591 = vmatpush1.msra.mxu0 0.0
    %1592 = vmatprep.subr.mxu0 0.0
    %1593 = vmatpush1.msra.mxu0 0.0
    %1594 = vmatprep.subr.mxu0 0.0
    %1595 = vmatpush1.msra.mxu0 0.0
    %1596 = vmatprep.subr.mxu0 0.0
    %1597 = vmatpush1.msra.mxu0 0.0
    %1598 = vmatprep.subr.mxu0 0.0
    %1599 = vmatpush1.msra.mxu0 0.0
    %1600 = vmatprep.subr.mxu0 0.0
    %1601 = vmatpush1.msra.mxu0 0.0
    %1602 = vmatprep.subr.mxu0 0.0
    %1603 = vmatpush1.msra.mxu0 0.0
    %1604 = vmatprep.subr.mxu0 0.0
    %1605 = vmatpush1.msra.mxu0 0.0
    %1606 = vmatprep.subr.mxu0 0.0
    %1607 = vmatpush1.msra.mxu0 0.0
    %1608 = vmatprep.subr.mxu0 0.0
    %1609 = vmatpush1.msra.mxu0 0.0
    %1610 = vmatprep.subr.mxu0 0.0
    %1611 = vmatpush1.msra.mxu0 0.0
    %1612 = vmatprep.subr.mxu0 0.0
    %1613 = vmatpush1.msra.mxu0 0.0
    %1614 = vmatprep.subr.mxu0 0.0
    %1615 = vmatpush1.msra.mxu0 0.0
    %1616 = vmatprep.subr.mxu0 0.0
    %1617 = vmatpush1.msra.mxu0 0.0
    %1618 = vmatprep.subr.mxu0 0.0
    %1619 = vmatpush1.msra.mxu0 0.0
    %1620 = vmatprep.subr.mxu0 0.0
    %1621 = vmatpush1.msra.mxu0 0.0
    %1622 = vmatprep.subr.mxu0 0.0
    %1623 = vmatpush1.msra.mxu0 0.0
    %1624 = vmatprep.subr.mxu0 0.0
    %1625 = vmatpush1.msra.mxu0 0.0
    %1626 = vmatprep.subr.mxu0 0.0
    %1627 = vmatpush1.msra.mxu0 0.0
    %1628 = vmatprep.subr.mxu0 0.0
    %1629 = vmatpush1.msra.mxu0 0.0
    %1630 = vmatprep.subr.mxu0 0.0
    %1631 = vmatpush1.msra.mxu0 0.0
    %1632 = vmatprep.subr.mxu0 0.0
    %1633 = vmatpush1.msra.mxu0 0.0
    %1634 = vmatprep.subr.mxu0 0.0
    %1635 = vmatpush1.msra.mxu0 0.0
    %1636 = vmatprep.subr.mxu0 0.0
    %1637 = vmatpush1.msra.mxu0 0.0
    %1638 = vmatprep.subr.mxu0 0.0
    %1639 = vmatpush1.msra.mxu0 0.0
    %1640 = vmatprep.subr.mxu0 0.0
    %1641 = vmatpush1.msra.mxu0 0.0
    %1642 = vmatprep.subr.mxu0 0.0
    %1643 = vmatpush1.msra.mxu0 0.0
    %1644 = vmatprep.subr.mxu0 0.0
    %1645 = vmatpush1.msra.mxu0 0.0
    %1646 = vmatprep.mubr.f32.mxu0 0.0
    %1647 = vmatmul.mubr.f32.gmra.mrb[0].mxu0 %v1580
    %v1648 = vpop.f32.mrb[0].mxu0
    %v1649 = vadd.f32 %v1577, %v1648
    %v1650 = vpop.f32.mrb[0].mxu0
    %1651 = vdwg.mxu0
    %v1652 = vmul.f32 %v1649, %v1649
    %v1653 = vmul.f32 %v1649, %v1652
    %v1654 = vmul.f32 %v1653, 0.044715
    %v1655 = vadd.f32 %v1649, %v1654
    %v1656 = vmul.f32 %v1655, 0.7978846
    %v1657 = vtanh.pop %v1656
    %v1658 = vadd.f32 %v1657, 1.0
    %v1659 = vmul.f32 %v1658, 0.5
    %v1660 = vmul.f32 %v1649, %v1659
    %s1661 = scalar_lea.vmem %s16, 128
    %v1662 = vld [vmem:[%s1661] sm:$0xff]
    %v1663 = vld [vmem:[%s1661 + $0x8] sm:$0xff]
    %v1664 = vld [vmem:[%s1661 + $0x10] sm:$0xff]
    %v1665 = vld [vmem:[%s1661 + $0x18] sm:$0xff]
    %v1666 = vld [vmem:[%s1661 + $0x20] sm:$0xff]
    %v1667 = vld [vmem:[%s1661 + $0x28] sm:$0xff]
    %v1668 = vld [vmem:[%s1661 + $0x30] sm:$0xff]
    %v1669 = vld [vmem:[%s1661 + $0x38] sm:$0xff]
    %v1670 = vld [vmem:[%s1661 + $0x40] sm:$0xff]
    %v1671 = vld [vmem:[%s1661 + $0x48] sm:$0xff]
    %v1672 = vld [vmem:[%s1661 + $0x50] sm:$0xff]
    %v1673 = vld [vmem:[%s1661 + $0x58] sm:$0xff]
    %v1674 = vld [vmem:[%s1661 + $0x60] sm:$0xff]
    %v1675 = vld [vmem:[%s1661 + $0x68] sm:$0xff]
    %v1676 = vld [vmem:[%s1661 + $0x70] sm:$0xff]
    %v1677 = vld [vmem:[%s1661 + $0x78] sm:$0xff]
    %s1678 = scalar_lea.vmem %s17, 1
    %v1679 = vld [vmem:[%s1678] sm:$0x1]
    %v1681 = vlaneseq
    %v1682 = vshrl.u32 %v1681, 7
    %v1683 = vsub.s32 0, %v1682
    %v1684 = vrot.slane %v1679, %v1683
    %1686 = vmatprep.subr.mxu0 0.0
    %1687 = vmatpush1.msra.mxu0 %v1662
    %1688 = vmatprep.subr.mxu0 0.0
    %1689 = vmatpush1.msra.mxu0 %v1663
    %1690 = vmatprep.subr.mxu0 0.0
    %1691 = vmatpush1.msra.mxu0 %v1664
    %1692 = vmatprep.subr.mxu0 0.0
    %1693 = vmatpush1.msra.mxu0 %v1665
    %1694 = vmatprep.subr.mxu0 0.0
    %1695 = vmatpush1.msra.mxu0 %v1666
    %1696 = vmatprep.subr.mxu0 0.0
    %1697 = vmatpush1.msra.mxu0 %v1667
    %1698 = vmatprep.subr.mxu0 0.0
    %1699 = vmatpush1.msra.mxu0 %v1668
    %1700 = vmatprep.subr.mxu0 0.0
    %1701 = vmatpush1.msra.mxu0 %v1669
    %1702 = vmatprep.subr.mxu0 0.0
    %1703 = vmatpush1.msra.mxu0 %v1670
    %1704 = vmatprep.subr.mxu0 0.0
    %1705 = vmatpush1.msra.mxu0 %v1671
    %1706 = vmatprep.subr.mxu0 0.0
    %1707 = vmatpush1.msra.mxu0 %v1672
    %1708 = vmatprep.subr.mxu0 0.0
    %1709 = vmatpush1.msra.mxu0 %v1673
    %1710 = vmatprep.subr.mxu0 0.0
    %1711 = vmatpush1.msra.mxu0 %v1674
    %1712 = vmatprep.subr.mxu0 0.0
    %1713 = vmatpush1.msra.mxu0 %v1675
    %1714 = vmatprep.subr.mxu0 0.0
    %1715 = vmatpush1.msra.mxu0 %v1676
    %1716 = vmatprep.subr.mxu0 0.0
    %1717 = vmatpush1.msra.mxu0 %v1677
    %1718 = vmatprep.subr.mxu0 0.0
    %1719 = vmatpush1.msra.mxu0 0.0
    %1720 = vmatprep.subr.mxu0 0.0
    %1721 = vmatpush1.msra.mxu0 0.0
    %1722 = vmatprep.subr.mxu0 0.0
    %1723 = vmatpush1.msra.mxu0 0.0
    %1724 = vmatprep.subr.mxu0 0.0
    %1725 = vmatpush1.msra.mxu0 0.0
    %1726 = vmatprep.subr.mxu0 0.0
    %1727 = vmatpush1.msra.mxu0 0.0
    %1728 = vmatprep.subr.mxu0 0.0
    %1729 = vmatpush1.msra.mxu0 0.0
    %1730 = vmatprep.subr.mxu0 0.0
    %1731 = vmatpush1.msra.mxu0 0.0
    %1732 = vmatprep.subr.mxu0 0.0
    %1733 = vmatpush1.msra.mxu0 0.0
    %1734 = vmatprep.subr.mxu0 0.0
    %1735 = vmatpush1.msra.mxu0 0.0
    %1736 = vmatprep.subr.mxu0 0.0
    %1737 = vmatpush1.msra.mxu0 0.0
    %1738 = vmatprep.subr.mxu0 0.0
    %1739 = vmatpush1.msra.mxu0 0.0
    %1740 = vmatprep.subr.mxu0 0.0
    %1741 = vmatpush1.msra.mxu0 0.0
    %1742 = vmatprep.subr.mxu0 0.0
    %1743 = vmatpush1.msra.mxu0 0.0
    %1744 = vmatprep.subr.mxu0 0.0
    %1745 = vmatpush1.msra.mxu0 0.0
    %1746 = vmatprep.subr.mxu0 0.0
    %1747 = vmatpush1.msra.mxu0 0.0
    %1748 = vmatprep.subr.mxu0 0.0
    %1749 = vmatpush1.msra.mxu0 0.0
    %1750 = vmatprep.mubr.f32.mxu0 0.0
    %1751 = vmatmul.mubr.f32.gmra.mrb[0].mxu0 %v1660
    %v1752 = vpop.f32.mrb[0].mxu0
    %v1753 = vadd.f32 %v1684, %v1752
    %v1754 = vpop.f32.mrb[0].mxu0
    %1755 = vdwg.mxu0
    %v1756 = vadd.f32 %v1565, %v1753
    %s1757 = scalar_lea.vmem %s18, 1
    %v1758 = vld [vmem:[%s1757] sm:$0x1]
    %s1759 = scalar_lea.vmem %s19, 1
    %v1760 = vld [vmem:[%s1759] sm:$0x1]
    %v1761 = vsel %vm1112, %v1756, 0.0
    %1762 = vadd.xlane.f32.xlu0 %v1761
    %v1763 = vpop.xlane.xlu0 %1762
    %v1764 = vmul.f32 %v1763, 0.03125
    %v1765 = vmul.f32 %v1756, %v1756
    %v1766 = vsel %vm1112, %v1765, 0.0
    %1767 = vadd.xlane.f32.xlu0 %v1766
    %v1768 = vpop.xlane.xlu0 %1767
    %v1769 = vmul.f32 %v1768, 0.03125
    %v1770 = vmul.f32 %v1764, %v1764
    %v1771 = vsub.f32 %v1769, %v1770
    %v1772 = vsub.f32 %v1756, %v1764
    %v1773 = vadd.f32 %v1771, 1e-05
    %v1774 = vrsqrt.pop %v1773
    %v1775 = vmul.f32 %v1772, %v1774
    %v1777 = vlaneseq
    %v1778 = vshrl.u32 %v1777, 7
    %v1779 = vsub.s32 0, %v1778
    %v1780 = vrot.slane %v1758, %v1779
    %v1782 = vmul.f32 %v1775, %v1780
    %v1784 = vlaneseq
    %v1785 = vshrl.u32 %v1784, 7
    %v1786 = vsub.s32 0, %v1785
    %v1787 = vrot.slane %v1760, %v1786
    %v1789 = vadd.f32 %v1782, %v1787
    %s1790 = scalar_lea.vmem %s8, 64
    %v1791 = vld [vmem:[%s1790] sm:$0xff]
    %v1792 = vld [vmem:[%s1790 + $0x8] sm:$0xff]
    %v1793 = vld [vmem:[%s1790 + $0x10] sm:$0xff]
    %v1794 = vld [vmem:[%s1790 + $0x18] sm:$0xff]
    %s1795 = scalar_lea.vmem %s9, 2
    %v1796 = vld [vmem:[%s1795] sm:$0x1]
    %v1798 = vlaneseq
    %v1799 = vshrl.u32 %v1798, 7
    %v1800 = vsub.s32 0, %v1799
    %v1801 = vrot.slane %v1796, %v1800
    %v1804 = vsel %vm774, %v1789, 0
    %1806 = vmatprep.subr.mxu0 0.0
    %1807 = vmatpush1.msra.mxu0 %v1791
    %1808 = vmatprep.subr.mxu0 0.0
    %1809 = vmatpush1.msra.mxu0 %v1792
    %1810 = vmatprep.subr.mxu0 0.0
    %1811 = vmatpush1.msra.mxu0 %v1793
    %1812 = vmatprep.subr.mxu0 0.0
    %1813 = vmatpush1.msra.mxu0 %v1794
    %1814 = vmatprep.subr.mxu0 0.0
    %1815 = vmatpush1.msra.mxu0 0.0
    %1816 = vmatprep.subr.mxu0 0.0
    %1817 = vmatpush1.msra.mxu0 0.0
    %1818 = vmatprep.subr.mxu0 0.0
    %1819 = vmatpush1.msra.mxu0 0.0
    %1820 = vmatprep.subr.mxu0 0.0
    %1821 = vmatpush1.msra.mxu0 0.0
    %1822 = vmatprep.subr.mxu0 0.0
    %1823 = vmatpush1.msra.mxu0 0.0
    %1824 = vmatprep.subr.mxu0 0.0
    %1825 = vmatpush1.msra.mxu0 0.0
    %1826 = vmatprep.subr.mxu0 0.0
    %1827 = vmatpush1.msra.mxu0 0.0
    %1828 = vmatprep.subr.mxu0 0.0
    %1829 = vmatpush1.msra.mxu0 0.0
    %1830 = vmatprep.subr.mxu0 0.0
    %1831 = vmatpush1.msra.mxu0 0.0
    %1832 = vmatprep.subr.mxu0 0.0
    %1833 = vmatpush1.msra.mxu0 0.0
    %1834 = vmatprep.subr.mxu0 0.0
    %1835 = vmatpush1.msra.mxu0 0.0
    %1836 = vmatprep.subr.mxu0 0.0
    %1837 = vmatpush1.msra.mxu0 0.0
    %1838 = vmatprep.subr.mxu0 0.0
    %1839 = vmatpush1.msra.mxu0 0.0
    %1840 = vmatprep.subr.mxu0 0.0
    %1841 = vmatpush1.msra.mxu0 0.0
    %1842 = vmatprep.subr.mxu0 0.0
    %1843 = vmatpush1.msra.mxu0 0.0
    %1844 = vmatprep.subr.mxu0 0.0
    %1845 = vmatpush1.msra.mxu0 0.0
    %1846 = vmatprep.subr.mxu0 0.0
    %1847 = vmatpush1.msra.mxu0 0.0
    %1848 = vmatprep.subr.mxu0 0.0
    %1849 = vmatpush1.msra.mxu0 0.0
    %1850 = vmatprep.subr.mxu0 0.0
    %1851 = vmatpush1.msra.mxu0 0.0
    %1852 = vmatprep.subr.mxu0 0.0
    %1853 = vmatpush1.msra.mxu0 0.0
    %1854 = vmatprep.subr.mxu0 0.0
    %1855 = vmatpush1.msra.mxu0 0.0
    %1856 = vmatprep.subr.mxu0 0.0
    %1857 = vmatpush1.msra.mxu0 0.0
    %1858 = vmatprep.subr.mxu0 0.0
    %1859 = vmatpush1.msra.mxu0 0.0
    %1860 = vmatprep.subr.mxu0 0.0
    %1861 = vmatpush1.msra.mxu0 0.0
    %1862 = vmatprep.subr.mxu0 0.0
    %1863 = vmatpush1.msra.mxu0 0.0
    %1864 = vmatprep.subr.mxu0 0.0
    %1865 = vmatpush1.msra.mxu0 0.0
    %1866 = vmatprep.subr.mxu0 0.0
    %1867 = vmatpush1.msra.mxu0 0.0
    %1868 = vmatprep.subr.mxu0 0.0
    %1869 = vmatpush1.msra.mxu0 0.0
    %1870 = vmatprep.mubr.f32.mxu0 0.0
    %1871 = vmatmul.mubr.f32.gmra.mrb[0].mxu0 %v1804
    %v1872 = vpop.f32.mrb[0].mxu0
    %v1873 = vadd.f32 %v1801, %v1872
    %v1874 = vpop.f32.mrb[0].mxu0
    %1875 = vdwg.mxu0
    %s1876 = scalar_lea.vmem %s10, 64
    %v1877 = vld [vmem:[%s1876] sm:$0xff]
    %v1878 = vld [vmem:[%s1876 + $0x8] sm:$0xff]
    %v1879 = vld [vmem:[%s1876 + $0x10] sm:$0xff]
    %v1880 = vld [vmem:[%s1876 + $0x18] sm:$0xff]
    %s1881 = scalar_lea.vmem %s11, 2
    %v1882 = vld [vmem:[%s1881] sm:$0x1]
    %v1884 = vlaneseq
    %v1885 = vshrl.u32 %v1884, 7
    %v1886 = vsub.s32 0, %v1885
    %v1887 = vrot.slane %v1882, %v1886
    %v1890 = vsel %vm774, %v1873, 0
    %1892 = vmatprep.subr.mxu0 0.0
    %1893 = vmatpush1.msra.mxu0 %v1877
    %1894 = vmatprep.subr.mxu0 0.0
    %1895 = vmatpush1.msra.mxu0 %v1878
    %1896 = vmatprep.subr.mxu0 0.0
    %1897 = vmatpush1.msra.mxu0 %v1879
    %1898 = vmatprep.subr.mxu0 0.0
    %1899 = vmatpush1.msra.mxu0 %v1880
    %1900 = vmatprep.subr.mxu0 0.0
    %1901 = vmatpush1.msra.mxu0 0.0
    %1902 = vmatprep.subr.mxu0 0.0
    %1903 = vmatpush1.msra.mxu0 0.0
    %1904 = vmatprep.subr.mxu0 0.0
    %1905 = vmatpush1.msra.mxu0 0.0
    %1906 = vmatprep.subr.mxu0 0.0
    %1907 = vmatpush1.msra.mxu0 0.0
    %1908 = vmatprep.subr.mxu0 0.0
    %1909 = vmatpush1.msra.mxu0 0.0
    %1910 = vmatprep.subr.mxu0 0.0
    %1911 = vmatpush1.msra.mxu0 0.0
    %1912 = vmatprep.subr.mxu0 0.0
    %1913 = vmatpush1.msra.mxu0 0.0
    %1914 = vmatprep.subr.mxu0 0.0
    %1915 = vmatpush1.msra.mxu0 0.0
    %1916 = vmatprep.subr.mxu0 0.0
    %1917 = vmatpush1.msra.mxu0 0.0
    %1918 = vmatprep.subr.mxu0 0.0
    %1919 = vmatpush1.msra.mxu0 0.0
    %1920 = vmatprep.subr.mxu0 0.0
    %1921 = vmatpush1.msra.mxu0 0.0
    %1922 = vmatprep.subr.mxu0 0.0
    %1923 = vmatpush1.msra.mxu0 0.0
    %1924 = vmatprep.subr.mxu0 0.0
    %1925 = vmatpush1.msra.mxu0 0.0
    %1926 = vmatprep.subr.mxu0 0.0
    %1927 = vmatpush1.msra.mxu0 0.0
    %1928 = vmatprep.subr.mxu0 0.0
    %1929 = vmatpush1.msra.mxu0 0.0
    %1930 = vmatprep.subr.mxu0 0.0
    %1931 = vmatpush1.msra.mxu0 0.0
    %1932 = vmatprep.subr.mxu0 0.0
    %1933 = vmatpush1.msra.mxu0 0.0
    %1934 = vmatprep.subr.mxu0 0.0
    %1935 = vmatpush1.msra.mxu0 0.0
    %1936 = vmatprep.subr.mxu0 0.0
    %1937 = vmatpush1.msra.mxu0 0.0
    %1938 = vmatprep.subr.mxu0 0.0
    %1939 = vmatpush1.msra.mxu0 0.0
    %1940 = vmatprep.subr.mxu0 0.0
    %1941 = vmatpush1.msra.mxu0 0.0
    %1942 = vmatprep.subr.mxu0 0.0
    %1943 = vmatpush1.msra.mxu0 0.0
    %1944 = vmatprep.subr.mxu0 0.0
    %1945 = vmatpush1.msra.mxu0 0.0
    %1946 = vmatprep.subr.mxu0 0.0
    %1947 = vmatpush1.msra.mxu0 0.0
    %1948 = vmatprep.subr.mxu0 0.0
    %1949 = vmatpush1.msra.mxu0 0.0
    %1950 = vmatprep.subr.mxu0 0.0
    %1951 = vmatpush1.msra.mxu0 0.0
    %1952 = vmatprep.subr.mxu0 0.0
    %1953 = vmatpush1.msra.mxu0 0.0
    %1954 = vmatprep.subr.mxu0 0.0
    %1955 = vmatpush1.msra.mxu0 0.0
    %1956 = vmatprep.mubr.f32.mxu0 0.0
    %1957 = vmatmul.mubr.f32.gmra.mrb[0].mxu0 %v1890
    %v1958 = vpop.f32.mrb[0].mxu0
    %v1959 = vadd.f32 %v1887, %v1958
    %v1960 = vpop.f32.mrb[0].mxu0
    %1961 = vdwg.mxu0
    %v1962 = vadd.f32 %v1789, %v1959
    %s1963 = scalar_lea.vmem %s12, 2
    %v1964 = vld [vmem:[%s1963] sm:$0x1]
    %s1965 = scalar_lea.vmem %s13, 2
    %v1966 = vld [vmem:[%s1965] sm:$0x1]
    %v1967 = vsel %vm1112, %v1962, 0.0
    %1968 = vadd.xlane.f32.xlu0 %v1967
    %v1969 = vpop.xlane.xlu0 %1968
    %v1970 = vmul.f32 %v1969, 0.03125
    %v1971 = vmul.f32 %v1962, %v1962
    %v1972 = vsel %vm1112, %v1971, 0.0
    %1973 = vadd.xlane.f32.xlu0 %v1972
    %v1974 = vpop.xlane.xlu0 %1973
    %v1975 = vmul.f32 %v1974, 0.03125
    %v1976 = vmul.f32 %v1970, %v1970
    %v1977 = vsub.f32 %v1975, %v1976
    %v1978 = vsub.f32 %v1962, %v1970
    %v1979 = vadd.f32 %v1977, 1e-05
    %v1980 = vrsqrt.pop %v1979
    %v1981 = vmul.f32 %v1978, %v1980
    %v1983 = vlaneseq
    %v1984 = vshrl.u32 %v1983, 7
    %v1985 = vsub.s32 0, %v1984
    %v1986 = vrot.slane %v1964, %v1985
    %v1988 = vmul.f32 %v1981, %v1986
    %v1990 = vlaneseq
    %v1991 = vshrl.u32 %v1990, 7
    %v1992 = vsub.s32 0, %v1991
    %v1993 = vrot.slane %v1966, %v1992
    %v1995 = vadd.f32 %v1988, %v1993
    %s1996 = scalar_lea.vmem %s14, 64
    %v1997 = vld [vmem:[%s1996] sm:$0xff]
    %v1998 = vld [vmem:[%s1996 + $0x8] sm:$0xff]
    %v1999 = vld [vmem:[%s1996 + $0x10] sm:$0xff]
    %v2000 = vld [vmem:[%s1996 + $0x18] sm:$0xff]
    %s2001 = scalar_lea.vmem %s15, 2
    %v2002 = vld [vmem:[%s2001] sm:$0x1]
    %v2004 = vlaneseq
    %v2005 = vshrl.u32 %v2004, 7
    %v2006 = vsub.s32 0, %v2005
    %v2007 = vrot.slane %v2002, %v2006
    %v2010 = vsel %vm774, %v1995, 0
    %2012 = vmatprep.subr.mxu0 0.0
    %2013 = vmatpush1.msra.mxu0 %v1997
    %2014 = vmatprep.subr.mxu0 0.0
    %2015 = vmatpush1.msra.mxu0 %v1998
    %2016 = vmatprep.subr.mxu0 0.0
    %2017 = vmatpush1.msra.mxu0 %v1999
    %2018 = vmatprep.subr.mxu0 0.0
    %2019 = vmatpush1.msra.mxu0 %v2000
    %2020 = vmatprep.subr.mxu0 0.0
    %2021 = vmatpush1.msra.mxu0 0.0
    %2022 = vmatprep.subr.mxu0 0.0
    %2023 = vmatpush1.msra.mxu0 0.0
    %2024 = vmatprep.subr.mxu0 0.0
    %2025 = vmatpush1.msra.mxu0 0.0
    %2026 = vmatprep.subr.mxu0 0.0
    %2027 = vmatpush1.msra.mxu0 0.0
    %2028 = vmatprep.subr.mxu0 0.0
    %2029 = vmatpush1.msra.mxu0 0.0
    %2030 = vmatprep.subr.mxu0 0.0
    %2031 = vmatpush1.msra.mxu0 0.0
    %2032 = vmatprep.subr.mxu0 0.0
    %2033 = vmatpush1.msra.mxu0 0.0
    %2034 = vmatprep.subr.mxu0 0.0
    %2035 = vmatpush1.msra.mxu0 0.0
    %2036 = vmatprep.subr.mxu0 0.0
    %2037 = vmatpush1.msra.mxu0 0.0
    %2038 = vmatprep.subr.mxu0 0.0
    %2039 = vmatpush1.msra.mxu0 0.0
    %2040 = vmatprep.subr.mxu0 0.0
    %2041 = vmatpush1.msra.mxu0 0.0
    %2042 = vmatprep.subr.mxu0 0.0
    %2043 = vmatpush1.msra.mxu0 0.0
    %2044 = vmatprep.subr.mxu0 0.0
    %2045 = vmatpush1.msra.mxu0 0.0
    %2046 = vmatprep.subr.mxu0 0.0
    %2047 = vmatpush1.msra.mxu0 0.0
    %2048 = vmatprep.subr.mxu0 0.0
    %2049 = vmatpush1.msra.mxu0 0.0
    %2050 = vmatprep.subr.mxu0 0.0
    %2051 = vmatpush1.msra.mxu0 0.0
    %2052 = vmatprep.subr.mxu0 0.0
    %2053 = vmatpush1.msra.mxu0 0.0
    %2054 = vmatprep.subr.mxu0 0.0
    %2055 = vmatpush1.msra.mxu0 0.0
    %2056 = vmatprep.subr.mxu0 0.0
    %2057 = vmatpush1.msra.mxu0 0.0
    %2058 = vmatprep.subr.mxu0 0.0
    %2059 = vmatpush1.msra.mxu0 0.0
    %2060 = vmatprep.subr.mxu0 0.0
    %2061 = vmatpush1.msra.mxu0 0.0
    %2062 = vmatprep.subr.mxu0 0.0
    %2063 = vmatpush1.msra.mxu0 0.0
    %2064 = vmatprep.subr.mxu0 0.0
    %2065 = vmatpush1.msra.mxu0 0.0
    %2066 = vmatprep.subr.mxu0 0.0
    %2067 = vmatpush1.msra.mxu0 0.0
    %2068 = vmatprep.subr.mxu0 0.0
    %2069 = vmatpush1.msra.mxu0 0.0
    %2070 = vmatprep.subr.mxu0 0.0
    %2071 = vmatpush1.msra.mxu0 0.0
    %2072 = vmatprep.subr.mxu0 0.0
    %2073 = vmatpush1.msra.mxu0 0.0
    %2074 = vmatprep.subr.mxu0 0.0
    %2075 = vmatpush1.msra.mxu0 0.0
    %2076 = vmatprep.mubr.f32.mxu0 0.0
    %2077 = vmatmul.mubr.f32.gmra.mrb[0].mxu0 %v2010
    %v2078 = vpop.f32.mrb[0].mxu0
    %v2079 = vadd.f32 %v2007, %v2078
    %v2080 = vpop.f32.mrb[0].mxu0
    %2081 = vdwg.mxu0
    %v2082 = vmul.f32 %v2079, %v2079
    %v2083 = vmul.f32 %v2079, %v2082
    %v2084 = vmul.f32 %v2083, 0.044715
    %v2085 = vadd.f32 %v2079, %v2084
    %v2086 = vmul.f32 %v2085, 0.7978846
    %v2087 = vtanh.pop %v2086
    %v2088 = vadd.f32 %v2087, 1.0
    %v2089 = vmul.f32 %v2088, 0.5
    %v2090 = vmul.f32 %v2079, %v2089
    %s2091 = scalar_lea.vmem %s16, 256
    %v2092 = vld [vmem:[%s2091] sm:$0xff]
    %v2093 = vld [vmem:[%s2091 + $0x8] sm:$0xff]
    %v2094 = vld [vmem:[%s2091 + $0x10] sm:$0xff]
    %v2095 = vld [vmem:[%s2091 + $0x18] sm:$0xff]
    %v2096 = vld [vmem:[%s2091 + $0x20] sm:$0xff]
    %v2097 = vld [vmem:[%s2091 + $0x28] sm:$0xff]
    %v2098 = vld [vmem:[%s2091 + $0x30] sm:$0xff]
    %v2099 = vld [vmem:[%s2091 + $0x38] sm:$0xff]
    %v2100 = vld [vmem:[%s2091 + $0x40] sm:$0xff]
    %v2101 = vld [vmem:[%s2091 + $0x48] sm:$0xff]
    %v2102 = vld [vmem:[%s2091 + $0x50] sm:$0xff]
    %v2103 = vld [vmem:[%s2091 + $0x58] sm:$0xff]
    %v2104 = vld [vmem:[%s2091 + $0x60] sm:$0xff]
    %v2105 = vld [vmem:[%s2091 + $0x68] sm:$0xff]
    %v2106 = vld [vmem:[%s2091 + $0x70] sm:$0xff]
    %v2107 = vld [vmem:[%s2091 + $0x78] sm:$0xff]
    %s2108 = scalar_lea.vmem %s17, 2
    %v2109 = vld [vmem:[%s2108] sm:$0x1]
    %v2111 = vlaneseq
    %v2112 = vshrl.u32 %v2111, 7
    %v2113 = vsub.s32 0, %v2112
    %v2114 = vrot.slane %v2109, %v2113
    %2116 = vmatprep.subr.mxu0 0.0
    %2117 = vmatpush1.msra.mxu0 %v2092
    %2118 = vmatprep.subr.mxu0 0.0
    %2119 = vmatpush1.msra.mxu0 %v2093
    %2120 = vmatprep.subr.mxu0 0.0
    %2121 = vmatpush1.msra.mxu0 %v2094
    %2122 = vmatprep.subr.mxu0 0.0
    %2123 = vmatpush1.msra.mxu0 %v2095
    %2124 = vmatprep.subr.mxu0 0.0
    %2125 = vmatpush1.msra.mxu0 %v2096
    %2126 = vmatprep.subr.mxu0 0.0
    %2127 = vmatpush1.msra.mxu0 %v2097
    %2128 = vmatprep.subr.mxu0 0.0
    %2129 = vmatpush1.msra.mxu0 %v2098
    %2130 = vmatprep.subr.mxu0 0.0
    %2131 = vmatpush1.msra.mxu0 %v2099
    %2132 = vmatprep.subr.mxu0 0.0
    %2133 = vmatpush1.msra.mxu0 %v2100
    %2134 = vmatprep.subr.mxu0 0.0
    %2135 = vmatpush1.msra.mxu0 %v2101
    %2136 = vmatprep.subr.mxu0 0.0
    %2137 = vmatpush1.msra.mxu0 %v2102
    %2138 = vmatprep.subr.mxu0 0.0
    %2139 = vmatpush1.msra.mxu0 %v2103
    %2140 = vmatprep.subr.mxu0 0.0
    %2141 = vmatpush1.msra.mxu0 %v2104
    %2142 = vmatprep.subr.mxu0 0.0
    %2143 = vmatpush1.msra.mxu0 %v2105
    %2144 = vmatprep.subr.mxu0 0.0
    %2145 = vmatpush1.msra.mxu0 %v2106
    %2146 = vmatprep.subr.mxu0 0.0
    %2147 = vmatpush1.msra.mxu0 %v2107
    %2148 = vmatprep.subr.mxu0 0.0
    %2149 = vmatpush1.msra.mxu0 0.0
    %2150 = vmatprep.subr.mxu0 0.0
    %2151 = vmatpush1.msra.mxu0 0.0
    %2152 = vmatprep.subr.mxu0 0.0
    %2153 = vmatpush1.msra.mxu0 0.0
    %2154 = vmatprep.subr.mxu0 0.0
    %2155 = vmatpush1.msra.mxu0 0.0
    %2156 = vmatprep.subr.mxu0 0.0
    %2157 = vmatpush1.msra.mxu0 0.0
    %2158 = vmatprep.subr.mxu0 0.0
    %2159 = vmatpush1.msra.mxu0 0.0
    %2160 = vmatprep.subr.mxu0 0.0
    %2161 = vmatpush1.msra.mxu0 0.0
    %2162 = vmatprep.subr.mxu0 0.0
    %2163 = vmatpush1.msra.mxu0 0.0
    %2164 = vmatprep.subr.mxu0 0.0
    %2165 = vmatpush1.msra.mxu0 0.0
    %2166 = vmatprep.subr.mxu0 0.0
    %2167 = vmatpush1.msra.mxu0 0.0
    %2168 = vmatprep.subr.mxu0 0.0
    %2169 = vmatpush1.msra.mxu0 0.0
    %2170 = vmatprep.subr.mxu0 0.0
    %2171 = vmatpush1.msra.mxu0 0.0
    %2172 = vmatprep.subr.mxu0 0.0
    %2173 = vmatpush1.msra.mxu0 0.0
    %2174 = vmatprep.subr.mxu0 0.0
    %2175 = vmatpush1.msra.mxu0 0.0
    %2176 = vmatprep.subr.mxu0 0.0
    %2177 = vmatpush1.msra.mxu0 0.0
    %2178 = vmatprep.subr.mxu0 0.0
    %2179 = vmatpush1.msra.mxu0 0.0
    %2180 = vmatprep.mubr.f32.mxu0 0.0
    %2181 = vmatmul.mubr.f32.gmra.mrb[0].mxu0 %v2090
    %v2182 = vpop.f32.mrb[0].mxu0
    %v2183 = vadd.f32 %v2114, %v2182
    %v2184 = vpop.f32.mrb[0].mxu0
    %2185 = vdwg.mxu0
    %v2186 = vadd.f32 %v1995, %v2183
    %s2187 = scalar_lea.vmem %s18, 2
    %v2188 = vld [vmem:[%s2187] sm:$0x1]
    %s2189 = scalar_lea.vmem %s19, 2
    %v2190 = vld [vmem:[%s2189] sm:$0x1]
    %v2191 = vsel %vm1112, %v2186, 0.0
    %2192 = vadd.xlane.f32.xlu0 %v2191
    %v2193 = vpop.xlane.xlu0 %2192
    %v2194 = vmul.f32 %v2193, 0.03125
    %v2195 = vmul.f32 %v2186, %v2186
    %v2196 = vsel %vm1112, %v2195, 0.0
    %2197 = vadd.xlane.f32.xlu0 %v2196
    %v2198 = vpop.xlane.xlu0 %2197
    %v2199 = vmul.f32 %v2198, 0.03125
    %v2200 = vmul.f32 %v2194, %v2194
    %v2201 = vsub.f32 %v2199, %v2200
    %v2202 = vsub.f32 %v2186, %v2194
    %v2203 = vadd.f32 %v2201, 1e-05
    %v2204 = vrsqrt.pop %v2203
    %v2205 = vmul.f32 %v2202, %v2204
    %v2207 = vlaneseq
    %v2208 = vshrl.u32 %v2207, 7
    %v2209 = vsub.s32 0, %v2208
    %v2210 = vrot.slane %v2188, %v2209
    %v2212 = vmul.f32 %v2205, %v2210
    %v2214 = vlaneseq
    %v2215 = vshrl.u32 %v2214, 7
    %v2216 = vsub.s32 0, %v2215
    %v2217 = vrot.slane %v2190, %v2216
    %v2219 = vadd.f32 %v2212, %v2217
    %v2220 = vld [vmem:[%s20] sm:$0xff]
    %v2221 = vld [vmem:[%s20 + $0x8] sm:$0xff]
    %v2222 = vld [vmem:[%s20 + $0x10] sm:$0xff]
    %v2223 = vld [vmem:[%s20 + $0x18] sm:$0xff]
    %v2224 = vld [vmem:[%s21] sm:$0x1]
    %v2226 = vlaneseq
    %v2227 = vshrl.u32 %v2226, 7
    %v2228 = vsub.s32 0, %v2227
    %v2229 = vrot.slane %v2224, %v2228
    %v2232 = vsel %vm774, %v2219, 0
    %2234 = vmatprep.subr.mxu0 0.0
    %2235 = vmatpush1.msra.mxu0 %v2220
    %2236 = vmatprep.subr.mxu0 0.0
    %2237 = vmatpush1.msra.mxu0 %v2221
    %2238 = vmatprep.subr.mxu0 0.0
    %2239 = vmatpush1.msra.mxu0 %v2222
    %2240 = vmatprep.subr.mxu0 0.0
    %2241 = vmatpush1.msra.mxu0 %v2223
    %2242 = vmatprep.subr.mxu0 0.0
    %2243 = vmatpush1.msra.mxu0 0.0
    %2244 = vmatprep.subr.mxu0 0.0
    %2245 = vmatpush1.msra.mxu0 0.0
    %2246 = vmatprep.subr.mxu0 0.0
    %2247 = vmatpush1.msra.mxu0 0.0
    %2248 = vmatprep.subr.mxu0 0.0
    %2249 = vmatpush1.msra.mxu0 0.0
    %2250 = vmatprep.subr.mxu0 0.0
    %2251 = vmatpush1.msra.mxu0 0.0
    %2252 = vmatprep.subr.mxu0 0.0
    %2253 = vmatpush1.msra.mxu0 0.0
    %2254 = vmatprep.subr.mxu0 0.0
    %2255 = vmatpush1.msra.mxu0 0.0
    %2256 = vmatprep.subr.mxu0 0.0
    %2257 = vmatpush1.msra.mxu0 0.0
    %2258 = vmatprep.subr.mxu0 0.0
    %2259 = vmatpush1.msra.mxu0 0.0
    %2260 = vmatprep.subr.mxu0 0.0
    %2261 = vmatpush1.msra.mxu0 0.0
    %2262 = vmatprep.subr.mxu0 0.0
    %2263 = vmatpush1.msra.mxu0 0.0
    %2264 = vmatprep.subr.mxu0 0.0
    %2265 = vmatpush1.msra.mxu0 0.0
    %2266 = vmatprep.subr.mxu0 0.0
    %2267 = vmatpush1.msra.mxu0 0.0
    %2268 = vmatprep.subr.mxu0 0.0
    %2269 = vmatpush1.msra.mxu0 0.0
    %2270 = vmatprep.subr.mxu0 0.0
    %2271 = vmatpush1.msra.mxu0 0.0
    %2272 = vmatprep.subr.mxu0 0.0
    %2273 = vmatpush1.msra.mxu0 0.0
    %2274 = vmatprep.subr.mxu0 0.0
    %2275 = vmatpush1.msra.mxu0 0.0
    %2276 = vmatprep.subr.mxu0 0.0
    %2277 = vmatpush1.msra.mxu0 0.0
    %2278 = vmatprep.subr.mxu0 0.0
    %2279 = vmatpush1.msra.mxu0 0.0
    %2280 = vmatprep.subr.mxu0 0.0
    %2281 = vmatpush1.msra.mxu0 0.0
    %2282 = vmatprep.subr.mxu0 0.0
    %2283 = vmatpush1.msra.mxu0 0.0
    %2284 = vmatprep.subr.mxu0 0.0
    %2285 = vmatpush1.msra.mxu0 0.0
    %2286 = vmatprep.subr.mxu0 0.0
    %2287 = vmatpush1.msra.mxu0 0.0
    %2288 = vmatprep.subr.mxu0 0.0
    %2289 = vmatpush1.msra.mxu0 0.0
    %2290 = vmatprep.subr.mxu0 0.0
    %2291 = vmatpush1.msra.mxu0 0.0
    %2292 = vmatprep.subr.mxu0 0.0
    %2293 = vmatpush1.msra.mxu0 0.0
    %2294 = vmatprep.subr.mxu0 0.0
    %2295 = vmatpush1.msra.mxu0 0.0
    %2296 = vmatprep.subr.mxu0 0.0
    %2297 = vmatpush1.msra.mxu0 0.0
    %2298 = vmatprep.mubr.f32.mxu0 0.0
    %2299 = vmatmul.mubr.f32.gmra.mrb[0].mxu0 %v2232
    %v2300 = vpop.f32.mrb[0].mxu0
    %v2301 = vadd.f32 %v2229, %v2300
    %v2302 = vpop.f32.mrb[0].mxu0
    %2303 = vdwg.mxu0
    %2304 = vst [vmem:[#allocation4] sm:$0x3] %v2301
    // Predicated region
    $region90: #{composite_attribute_analyzer.1} parent=1 // pred_check
      _
    $region91: #{composite_attribute_analyzer.1} parent=1 // pred_check_branch
      %2306 = sbr.rel (0) target = $region93
    $region92: #{composite_attribute_analyzer.1} parent=1 // pred_region
      %s2308 = ssub.s32 32, 32
      %2309 = vsyncadd [#allocation3], %s2308
      %s2311 = sshll.u32 [#allocation2], 4
      %s2312 = int_to_ptr.vmem [resolvable:$true] %s2311
      %2314 = dma.vmem_to_hbm [thread:$0]  %s2312, 32, %s22, [#allocation3]
    $region93: #{composite_attribute_analyzer.1} parent=1 // pred_fallthru
      _
    // Predicated region
    $region94: #{composite_attribute_analyzer.1} parent=1 // pred_check
      _
    $region95: #{composite_attribute_analyzer.1} parent=1 // pred_check_branch
      %2316 = sbr.rel (0) target = $region97
    $region96: #{composite_attribute_analyzer.1} parent=1 // pred_region
      %s2318 = ssub.s32 32, 32
      %2319 = vsyncadd [#allocation5], %s2318
      %s2321 = sshll.u32 [#allocation4], 4
      %s2322 = int_to_ptr.vmem [resolvable:$true] %s2321
      %2324 = dma.vmem_to_hbm [thread:$0]  %s2322, 32, %s23, [#allocation5]
    $region97: #{composite_attribute_analyzer.1} parent=1 // pred_fallthru
      _
    // Predicated region
    $region98: #{composite_attribute_analyzer.1} parent=1 // pred_check
      _
    $region99: #{composite_attribute_analyzer.1} parent=1 // pred_check_branch
      %2326 = sbr.rel (0) target = $region101
    $region100: #{composite_attribute_analyzer.1} parent=1 // pred_region
      %2327 = dma.done [#allocation3], 32
    $region101: #{composite_attribute_analyzer.1} parent=1 // pred_fallthru
      _
    // Predicated region
    $region102: #{composite_attribute_analyzer.1} parent=1 // pred_check
      _
    $region103: #{composite_attribute_analyzer.1} parent=1 // pred_check_branch
      %2329 = sbr.rel (0) target = $region105
    $region104: #{composite_attribute_analyzer.1} parent=1 // pred_region
      %2330 = dma.done [#allocation5], 32
    $region105: #{composite_attribute_analyzer.1} parent=1 // pred_fallthru
      _
    %2331 = vsyncpa [#allocation3], 1
    %2332 = vsyncpa [#allocation5], 1

</llo_original>
